<compile_context>
chip_gen: v6e
topology: v6e:2x2x1
jax: 0.10.0
libtpu: 0.0.40
codegen_flags: <defaults>
</compile_context>

<pallas_src>
import jax
import jax.numpy as jnp
from jax import lax
from jax.experimental import pallas as pl
from jax.experimental.pallas import tpu as pltpu

_EPS = 1e-12  # F.normalize default eps


def _round_up(n, m):
    return ((n + m - 1) // m) * m


def _pick_tb(bp, tb_req):
    """Multiple-of-8 tile that divides bp; >=2 grid steps when bp allows it."""
    cap = max(8, min(int(tb_req), bp))
    if cap >= bp and bp >= 16:
        cap = bp // 2          # guarantee >=2 grid steps (v7x megacore sharding)
    t = (cap // 8) * 8
    while t > 8 and bp % t:
        t -= 8
    return max(t, 8)


def _clip_to_clap_kernel(x_ref, w1_ref, b1_ref, w2_ref, b2_ref, w3_ref, b3_ref, o_ref):
    # Per-row inverse L2 norm of the input, computed in f32.
    xf = x_ref[...].astype(jnp.float32)
    inv_in = lax.rsqrt(jnp.maximum(jnp.sum(xf * xf, axis=1, keepdims=True), _EPS * _EPS))

    # fc1 with the input-norm scale folded into the (tb, hidden) matmul output:
    #   relu((s*x) @ W1 + b1) == relu(s * (x @ W1) + b1)
    h = jnp.dot(x_ref[...].astype(w1_ref.dtype), w1_ref[...],
                preferred_element_type=jnp.float32)
    h = jnp.maximum(h * inv_in + b1_ref[...], 0.0)

    # fc2
    h = jnp.dot(h.astype(w2_ref.dtype), w2_ref[...],
                preferred_element_type=jnp.float32)
    h = jnp.maximum(h + b2_ref[...], 0.0)

    # fc3
    out = jnp.dot(h.astype(w3_ref.dtype), w3_ref[...],
                  preferred_element_type=jnp.float32) + b3_ref[...]

    # Output L2 normalize (fused rsqrt; eps semantics match F.normalize).
    inv_out = lax.rsqrt(jnp.maximum(jnp.sum(out * out, axis=1, keepdims=True), _EPS * _EPS))
    o_ref[...] = (out * inv_out).astype(o_ref.dtype)


def clip_to_clap(x, params, *, tb=512, use_bf16=True, out_dtype=None):
    """x: (B, input_dim).  params: w1,b1,w2,b2,w3,b3 with weights (in, out), biases (1, out)."""
    w1, b1, w2, b2, w3, b3 = (params[k] for k in ("w1", "b1", "w2", "b2", "w3", "b3"))
    B, D = x.shape
    H1, H2, out_dim = w1.shape[1], w2.shape[1], w3.shape[1]
    out_dtype = x.dtype if out_dtype is None else jnp.dtype(out_dtype)

    # Pre-cast weights once in the wrapper (review item 1); biases stay f32 so the
    # bias add and f32 MXU accumulation keep full precision.
    wdt = jnp.bfloat16 if use_bf16 else jnp.float32
    w1, w2, w3 = (w.astype(wdt) for w in (w1, w2, w3))
    b1, b2, b3 = (b.astype(jnp.float32) for b in (b1, b2, b3))

    # Tile: multiple of 8, divides the padded batch, and yields >=2 grid steps.
    Bp = _round_up(B, 8)
    tb = _pick_tb(Bp, tb)
    if Bp != B:
        # Zero rows are harmless (0 * rsqrt(eps^2) = 0) and sliced off below.
        x = jnp.pad(x, ((0, Bp - B), (0, 0)))

    resident = lambda a: pl.BlockSpec(a.shape, lambda i: (0,) * a.ndim)  # noqa: E731

    flops = 2 * Bp * (D * H1 + H1 * H2 + H2 * out_dim)
    bytes_accessed = (
        Bp * D * x.dtype.itemsize + Bp * out_dim * out_dtype.itemsize
        + sum(int(a.size) * a.dtype.itemsize for a in (w1, b1, w2, b2, w3, b3)))
    cost = pl.CostEstimate(flops=flops, transcendentals=2 * Bp,
                           bytes_accessed=bytes_accessed)

    out = pl.pallas_call(
        _clip_to_clap_kernel,
        out_shape=jax.ShapeDtypeStruct((Bp, out_dim), out_dtype),
        grid_spec=pltpu.PrefetchScalarGridSpec(
            num_scalar_prefetch=0,
            grid=(Bp // tb,),
            in_specs=[
                pl.BlockSpec((tb, D), lambda i: (i, 0)),   # x: streamed over batch
                resident(w1), resident(b1),                # weights/biases: VMEM-resident
                resident(w2), resident(b2),
                resident(w3), resident(b3),
            ],
            out_specs=pl.BlockSpec((tb, out_dim), lambda i: (i, 0)),
        ),
        compiler_params=pltpu.CompilerParams(
            dimension_semantics=("parallel",),  # shards batch across TCs on v7x
        ),
        cost_estimate=cost,
    )(x, w1, b1, w2, b2, w3, b3)

    return out if Bp == B else out[:B]


def init_params(key, input_dim, hidden_dim, output_dim):
    """Deterministic synthetic init (nn.Linear-style fan-in uniform, stored transposed)."""
    ks = jax.random.split(key, 6)
    scale = lambda fan_in: 1.0 / jnp.sqrt(fan_in)  # noqa: E731
    u = jax.random.uniform
    return {
        "w1": u(ks[0], (input_dim, hidden_dim), jnp.float32, -scale(input_dim), scale(input_dim)),
        "b1": u(ks[1], (1, hidden_dim), jnp.float32, -scale(input_dim), scale(input_dim)),
        "w2": u(ks[2], (hidden_dim, hidden_dim), jnp.float32, -scale(hidden_dim), scale(hidden_dim)),
        "b2": u(ks[3], (1, hidden_dim), jnp.float32, -scale(hidden_dim), scale(hidden_dim)),
        "w3": u(ks[4], (hidden_dim, output_dim), jnp.float32, -scale(hidden_dim), scale(hidden_dim)),
        "b3": u(ks[5], (1, output_dim), jnp.float32, -scale(hidden_dim), scale(hidden_dim)),
    }


def _reference(x, p):
    xn = x / jnp.maximum(jnp.linalg.norm(x, axis=1, keepdims=True), _EPS)
    h = jnp.maximum(xn @ p["w1"] + p["b1"], 0.0)
    h = jnp.maximum(h @ p["w2"] + p["b2"], 0.0)
    o = h @ p["w3"] + p["b3"]
    return o / jnp.maximum(jnp.linalg.norm(o, axis=1, keepdims=True), _EPS)


if __name__ == "__main__":
    # Real module dims (512 / 256 / 512) — lane-aligned (multiples of 128).
    # batch=256 with the default tb sweep: _pick_tb yields tb=128 -> 2 pipelined,
    # megacore-shardable grid steps.
    batch, input_dim, hidden_dim, output_dim = 256, 512, 256, 512

    key = jax.random.PRNGKey(0)
    kx, kp = jax.random.split(key)
    x = jax.random.normal(kx, (batch, input_dim), dtype=jnp.float32)
    params = init_params(kp, input_dim, hidden_dim, output_dim)

    ref = _reference(x, params)

    # Default perf path: bf16 operands (resident bf16 weights), f32 accumulation.
    out = clip_to_clap(x, params)
    jax.block_until_ready(out)
    assert out.shape == (batch, output_dim)
    assert jnp.allclose(out, ref, atol=2e-2, rtol=2e-2), "bf16 path mismatch vs reference"

    # f32-operand path for tight numerics.
    out_f32 = clip_to_clap(x, params, use_bf16=False)
    jax.block_until_ready(out_f32)
    assert jnp.allclose(out_f32, ref, atol=1e-4, rtol=1e-4), "f32 path mismatch vs reference"

    # Non-multiple-of-8 batch exercises the pad + slice fallback path.
    out_odd = clip_to_clap(x[:37], params, use_bf16=False)
    jax.block_until_ready(out_odd)
    assert jnp.allclose(out_odd, ref[:37], atol=1e-4, rtol=1e-4), "padded path mismatch"

    print("KERNEL_OK")
</pallas_src>

<mosaic_0001>
module attributes {stable_mosaic.version = 11 : i64} {
  func.func @_clip_to_clap_kernel(%arg0: i32, %arg1: memref<128x512xf32, #tpu.memory_space<vmem>>, %arg2: memref<512x256xbf16, #tpu.memory_space<vmem>>, %arg3: memref<1x256xf32, #tpu.memory_space<vmem>>, %arg4: memref<256x256xbf16, #tpu.memory_space<vmem>>, %arg5: memref<1x256xf32, #tpu.memory_space<vmem>>, %arg6: memref<256x512xbf16, #tpu.memory_space<vmem>>, %arg7: memref<1x512xf32, #tpu.memory_space<vmem>>, %arg8: memref<128x512xf32, #tpu.memory_space<vmem>>) attributes {dimension_semantics = [#tpu.dimension_semantics<parallel>], iteration_bounds = array<i64: 2>, scalar_prefetch = 0 : i64, scratch_operands = 0 : i64, tpu.core_type = #tpu.core_type<tc>, window_params = [{transform_indices = @transform_0, window_bounds = array<i64: 128, 512>}, {pipeline_mode = #tpu.pipeline_mode<synchronous>, transform_indices = @transform_1, window_bounds = array<i64: 512, 256>}, {pipeline_mode = #tpu.pipeline_mode<synchronous>, transform_indices = @transform_2, window_bounds = array<i64: 1, 256>}, {pipeline_mode = #tpu.pipeline_mode<synchronous>, transform_indices = @transform_3, window_bounds = array<i64: 256, 256>}, {pipeline_mode = #tpu.pipeline_mode<synchronous>, transform_indices = @transform_4, window_bounds = array<i64: 1, 256>}, {pipeline_mode = #tpu.pipeline_mode<synchronous>, transform_indices = @transform_5, window_bounds = array<i64: 256, 512>}, {pipeline_mode = #tpu.pipeline_mode<synchronous>, transform_indices = @transform_6, window_bounds = array<i64: 1, 512>}, {transform_indices = @transform_7, window_bounds = array<i64: 128, 512>}]} {
    %c0 = arith.constant 0 : index
    %c0_0 = arith.constant 0 : index
    %0 = vector.load %arg1[%c0, %c0_0] : memref<128x512xf32, #tpu.memory_space<vmem>>, vector<128x512xf32>
    %1 = arith.mulf %0, %0 : vector<128x512xf32>
    %cst = arith.constant dense<0.000000e+00> : vector<128xf32>
    %2 = vector.multi_reduction <add>, %1, %cst [1] : vector<128x512xf32> to vector<128xf32>
    %3 = vector.shape_cast %2 : vector<128xf32> to vector<128x1xf32>
    %cst_1 = arith.constant 1.000000e-24 : f32
    %4 = vector.broadcast %cst_1 : f32 to vector<128x1xf32>
    %5 = arith.maximumf %3, %4 : vector<128x1xf32>
    %6 = math.rsqrt %5 : vector<128x1xf32>
    %c0_2 = arith.constant 0 : index
    %c0_3 = arith.constant 0 : index
    %7 = vector.load %arg1[%c0_2, %c0_3] : memref<128x512xf32, #tpu.memory_space<vmem>>, vector<128x512xf32>
    %8 = arith.truncf %7 : vector<128x512xf32> to vector<128x512xbf16>
    %c0_4 = arith.constant 0 : index
    %c0_5 = arith.constant 0 : index
    %9 = vector.load %arg2[%c0_4, %c0_5] : memref<512x256xbf16, #tpu.memory_space<vmem>>, vector<512x256xbf16>
    %cst_6 = arith.constant dense<0.000000e+00> : vector<128x256xf32>
    %10 = tpu.matmul %8, %9, %cst_6 {dimension_numbers = #tpu.dot_dimension_numbers<[1], [0], [0], [1], [0, 0, 1, 1], [], []>} : vector<128x512xbf16>, vector<512x256xbf16>, vector<128x256xf32> -> vector<128x256xf32>
    %11 = vector.broadcast %6 : vector<128x1xf32> to vector<128x256xf32>
    %12 = arith.mulf %10, %11 : vector<128x256xf32>
    %c0_7 = arith.constant 0 : index
    %c0_8 = arith.constant 0 : index
    %13 = vector.load %arg3[%c0_7, %c0_8] : memref<1x256xf32, #tpu.memory_space<vmem>>, vector<1x256xf32>
    %14 = vector.broadcast %13 : vector<1x256xf32> to vector<128x256xf32>
    %15 = arith.addf %12, %14 : vector<128x256xf32>
    %cst_9 = arith.constant 0.000000e+00 : f32
    %16 = vector.broadcast %cst_9 : f32 to vector<128x256xf32>
    %17 = arith.maximumf %15, %16 : vector<128x256xf32>
    %18 = arith.truncf %17 : vector<128x256xf32> to vector<128x256xbf16>
    %c0_10 = arith.constant 0 : index
    %c0_11 = arith.constant 0 : index
    %19 = vector.load %arg4[%c0_10, %c0_11] : memref<256x256xbf16, #tpu.memory_space<vmem>>, vector<256x256xbf16>
    %cst_12 = arith.constant dense<0.000000e+00> : vector<128x256xf32>
    %20 = tpu.matmul %18, %19, %cst_12 {dimension_numbers = #tpu.dot_dimension_numbers<[1], [0], [0], [1], [0, 0, 1, 1], [], []>} : vector<128x256xbf16>, vector<256x256xbf16>, vector<128x256xf32> -> vector<128x256xf32>
    %c0_13 = arith.constant 0 : index
    %c0_14 = arith.constant 0 : index
    %21 = vector.load %arg5[%c0_13, %c0_14] : memref<1x256xf32, #tpu.memory_space<vmem>>, vector<1x256xf32>
    %22 = vector.broadcast %21 : vector<1x256xf32> to vector<128x256xf32>
    %23 = arith.addf %20, %22 : vector<128x256xf32>
    %cst_15 = arith.constant 0.000000e+00 : f32
    %24 = vector.broadcast %cst_15 : f32 to vector<128x256xf32>
    %25 = arith.maximumf %23, %24 : vector<128x256xf32>
    %26 = arith.truncf %25 : vector<128x256xf32> to vector<128x256xbf16>
    %c0_16 = arith.constant 0 : index
    %c0_17 = arith.constant 0 : index
    %27 = vector.load %arg6[%c0_16, %c0_17] : memref<256x512xbf16, #tpu.memory_space<vmem>>, vector<256x512xbf16>
    %cst_18 = arith.constant dense<0.000000e+00> : vector<128x512xf32>
    %28 = tpu.matmul %26, %27, %cst_18 {dimension_numbers = #tpu.dot_dimension_numbers<[1], [0], [0], [1], [0, 0, 1, 1], [], []>} : vector<128x256xbf16>, vector<256x512xbf16>, vector<128x512xf32> -> vector<128x512xf32>
    %c0_19 = arith.constant 0 : index
    %c0_20 = arith.constant 0 : index
    %29 = vector.load %arg7[%c0_19, %c0_20] : memref<1x512xf32, #tpu.memory_space<vmem>>, vector<1x512xf32>
    %30 = vector.broadcast %29 : vector<1x512xf32> to vector<128x512xf32>
    %31 = arith.addf %28, %30 : vector<128x512xf32>
    %32 = arith.mulf %31, %31 : vector<128x512xf32>
    %cst_21 = arith.constant dense<0.000000e+00> : vector<128xf32>
    %33 = vector.multi_reduction <add>, %32, %cst_21 [1] : vector<128x512xf32> to vector<128xf32>
    %34 = vector.shape_cast %33 : vector<128xf32> to vector<128x1xf32>
    %cst_22 = arith.constant 1.000000e-24 : f32
    %35 = vector.broadcast %cst_22 : f32 to vector<128x1xf32>
    %36 = arith.maximumf %34, %35 : vector<128x1xf32>
    %37 = math.rsqrt %36 : vector<128x1xf32>
    %38 = vector.broadcast %37 : vector<128x1xf32> to vector<128x512xf32>
    %39 = arith.mulf %31, %38 : vector<128x512xf32>
    %c0_23 = arith.constant 0 : index
    %c0_24 = arith.constant 0 : index
    %40 = vector.load %arg8[%c0_23, %c0_24] : memref<128x512xf32, #tpu.memory_space<vmem>>, vector<128x512xf32>
    tpu.vector_store %arg8[%c0_23, %c0_24], %39 {strides = array<i32>} : memref<128x512xf32, #tpu.memory_space<vmem>>, vector<128x512xf32>,
    return
  }
  func.func @transform_0(%arg0: i32) -> (i32, i32) {
    %c0_i32 = arith.constant 0 : i32
    %c0_i32_0 = arith.constant 0 : i32
    return %arg0, %c0_i32 : i32, i32
  }
  func.func @transform_1(%arg0: i32) -> (i32, i32) {
    %c0_i32 = arith.constant 0 : i32
    %c0_i32_0 = arith.constant 0 : i32
    %c0_i32_1 = arith.constant 0 : i32
    return %c0_i32, %c0_i32_0 : i32, i32
  }
  func.func @transform_2(%arg0: i32) -> (i32, i32) {
    %c0_i32 = arith.constant 0 : i32
    %c0_i32_0 = arith.constant 0 : i32
    %c0_i32_1 = arith.constant 0 : i32
    return %c0_i32, %c0_i32_0 : i32, i32
  }
  func.func @transform_3(%arg0: i32) -> (i32, i32) {
    %c0_i32 = arith.constant 0 : i32
    %c0_i32_0 = arith.constant 0 : i32
    %c0_i32_1 = arith.constant 0 : i32
    return %c0_i32, %c0_i32_0 : i32, i32
  }
  func.func @transform_4(%arg0: i32) -> (i32, i32) {
    %c0_i32 = arith.constant 0 : i32
    %c0_i32_0 = arith.constant 0 : i32
    %c0_i32_1 = arith.constant 0 : i32
    return %c0_i32, %c0_i32_0 : i32, i32
  }
  func.func @transform_5(%arg0: i32) -> (i32, i32) {
    %c0_i32 = arith.constant 0 : i32
    %c0_i32_0 = arith.constant 0 : i32
    %c0_i32_1 = arith.constant 0 : i32
    return %c0_i32, %c0_i32_0 : i32, i32
  }
  func.func @transform_6(%arg0: i32) -> (i32, i32) {
    %c0_i32 = arith.constant 0 : i32
    %c0_i32_0 = arith.constant 0 : i32
    %c0_i32_1 = arith.constant 0 : i32
    return %c0_i32, %c0_i32_0 : i32, i32
  }
  func.func @transform_7(%arg0: i32) -> (i32, i32) {
    %c0_i32 = arith.constant 0 : i32
    %c0_i32_0 = arith.constant 0 : i32
    return %arg0, %c0_i32 : i32, i32
  }
}

</mosaic_0001>

<llo_original>
// kernel: tpu_custom_call.1
$region0: #{tpu_custom_call.1}
  #allocation0 [shape = 'u32[]', space=smem, size = 0x4, offset = 0x4, fixed_abs, tag = 'smem constant byte address 0x4 - core index']
  #allocation1 [shape = 'u32[144,128]{1,0:T(1,128)}', space=vmem, size = 0x12000, scoped, tag = 'internal scratch']
  %s0 = inlined_call_operand.hbm [shape: f32[256,512], index: 0, kind: input, shape index: {}]
  %s1 = inlined_call_operand.hbm [shape: bf16[512,256], index: 1, kind: input, shape index: {}]
  %s2 = inlined_call_operand.vmem [shape: f32[1,256], index: 2, kind: input, shape index: {}]
  %s3 = inlined_call_operand.hbm [shape: bf16[256,256], index: 3, kind: input, shape index: {}]
  %s4 = inlined_call_operand.hbm [shape: f32[1,256], index: 4, kind: input, shape index: {}]
  %s5 = inlined_call_operand.hbm [shape: bf16[256,512], index: 5, kind: input, shape index: {}]
  %s6 = inlined_call_operand.vmem [shape: f32[1,512], index: 6, kind: input, shape index: {}]
  %s7 = inlined_call_operand.hbm [shape: f32[256,512], index: 7, kind: output, shape index: {}]
  %s8 = sld [smem:[#allocation0]]
  $region81: #{tpu_custom_call.1} parent=0
    _
  %s10 = ssub.s32 1, %s8
  %s11 = scalar_select 0, %s10, %s8
  $region1: #{tpu_custom_call.1} parent=0
    #allocation2 [shape = 'u8[524288]{0}', space=vmem, size = 0x80000, scoped, tag = 'input window, operand 0']
    #allocation3 [shape = 's32[2]{0}', space=sflag, size = 0x8, scoped, tag = 'scoped memory for tpu_custom_call.1']
    #allocation4 [shape = 's32[2]{0}', space=sflag, size = 0x8, scoped, tag = 'scoped memory for tpu_custom_call.1']
    #allocation5 [shape = 'u8[262144]{0}', space=vmem, size = 0x40000, scoped, tag = 'input window, operand 1, single buffered']
    #allocation6 [shape = 's32[1]{0}', space=sflag, size = 0x4, scoped, tag = 'scoped memory for tpu_custom_call.1']
    #allocation7 [shape = 'u8[131072]{0}', space=vmem, size = 0x20000, scoped, tag = 'input window, operand 3, single buffered']
    #allocation8 [shape = 'u8[1024]{0}', space=vmem, size = 0x400, scoped, tag = 'input window, operand 4, single buffered']
    #allocation9 [shape = 's32[1]{0}', space=sflag, size = 0x4, scoped, tag = 'scoped memory for tpu_custom_call.1']
    #allocation10 [shape = 'u8[262144]{0}', space=vmem, size = 0x40000, scoped, tag = 'input window, operand 5, single buffered']
    #allocation11 [shape = 'u8[524288]{0}', space=vmem, size = 0x80000, scoped, tag = 'output window, operand 0']
    %12 = vsyncpa [#allocation3], 0
    %s13 = scalar_lea.sflag [#allocation3], 1
    %14 = vsyncpa %s13, 0
    %15 = vsyncpa [#allocation6], 0
    %16 = vsyncpa [#allocation9], 0
    %17 = vsyncpa [#allocation4], 0
    %s18 = scalar_lea.sflag [#allocation4], 1
    %19 = vsyncpa %s18, 0
    loop: start=0, step=1, limit=4
    $region2: #{tpu_custom_call.1} parent=1 // loop_pre_header
      _
    $region3: #{tpu_custom_call.1} parent=1 // loop_header
      %s21 = sphi 0, %s25
      %p22 = scmp.ge.s32.totalorder %s21, 4
      %s31 = sphi 0, %s33
      %s34 = sphi 0, %s31
      %s35 = sphi 0, %s34
      %s51 = sphi 0, %s35
      %s55 = sphi 0, %s55
      %s57 = sphi 0, %s55
      %s58 = sphi 0, %s57
      %s72 = sphi 0, %s58
      %s76 = sphi 0, %s76
      %s78 = sphi 0, %s76
      %s79 = sphi 0, %s78
      %s93 = sphi 0, %s79
      %s97 = sphi 0, %s97
      %s99 = sphi 0, %s97
      %s100 = sphi 0, %s99
      %s114 = sphi 0, %s100
      %s118 = sphi 0, %s118
      %s120 = sphi 0, %s118
      %s121 = sphi 0, %s120
      %s135 = sphi 0, %s121
      %s139 = sphi 0, %s139
      %s141 = sphi 0, %s139
      %s142 = sphi 0, %s141
      %s156 = sphi 0, %s142
      %s160 = sphi 0, %s160
      %s162 = sphi 0, %s160
      %s163 = sphi 0, %s162
      %s177 = sphi 0, %s163
      %s183 = sphi 0, %s185
      %s186 = sphi 0, %s183
      %s187 = sphi 0, %s186
      %s203 = sphi 0, %s187
    $region4: #{tpu_custom_call.1} parent=1 // loop_header_branch
      %24 = sbr.rel (%p22) target = $region8
    $region5: #{tpu_custom_call.1} parent=1 // loop_body
      %s26 = ssub.s32 %s21, 1
      %s27 = ssub.s32 %s21, 2
      %s28 = sadd.s32 %s21, 1
      %s29 = ssub.s32 %s21, %s28
      %p30 = scmp.eq.s32.totalorder %s29, 0
      %s32 = sadd.s32 %s31, 1
      %s33 = scalar_select %p30, %s31, %s32
      %p36 = pneg %p30
      %p37 = scmp.eq.s32.totalorder %s21, 1
      %p38 = por %p36, %p37
      %p39 = scmp.ne.s32.totalorder %s31, %s34
      %p40 = scmp.eq.s32.totalorder %s21, 0
      %p41 = por %p39, %p40
      %p42 = scmp.ne.s32.totalorder %s31, %s34
      %p43 = scmp.eq.s32.totalorder %s26, 1
      %p44 = por %p42, %p43
      %p45 = scmp.ne.s32.totalorder %s34, %s35
      %p46 = scmp.eq.s32.totalorder %s26, 0
      %p47 = por %p45, %p46
      %p48 = scmp.ne.s32.totalorder %s34, %s35
      %p49 = scmp.eq.s32.totalorder %s27, 1
      %p50 = por %p48, %p49
      %p52 = scmp.ne.s32.totalorder %s35, %s51
      %p53 = scmp.eq.s32.totalorder %s27, 0
      %p54 = por %p52, %p53
      %s56 = sadd.s32 %s55, 1
      %p59 = scmp.eq.s32.totalorder %s21, 1
      %p60 = scmp.ne.s32.totalorder %s55, %s57
      %p61 = scmp.eq.s32.totalorder %s21, 0
      %p62 = por %p60, %p61
      %p63 = scmp.ne.s32.totalorder %s55, %s57
      %p64 = scmp.eq.s32.totalorder %s26, 1
      %p65 = por %p63, %p64
      %p66 = scmp.ne.s32.totalorder %s57, %s58
      %p67 = scmp.eq.s32.totalorder %s26, 0
      %p68 = por %p66, %p67
      %p69 = scmp.ne.s32.totalorder %s57, %s58
      %p70 = scmp.eq.s32.totalorder %s27, 1
      %p71 = por %p69, %p70
      %p73 = scmp.ne.s32.totalorder %s58, %s72
      %p74 = scmp.eq.s32.totalorder %s27, 0
      %p75 = por %p73, %p74
      %s77 = sadd.s32 %s76, 1
      %p80 = scmp.eq.s32.totalorder %s21, 1
      %p81 = scmp.ne.s32.totalorder %s76, %s78
      %p82 = scmp.eq.s32.totalorder %s21, 0
      %p83 = por %p81, %p82
      %p84 = scmp.ne.s32.totalorder %s76, %s78
      %p85 = scmp.eq.s32.totalorder %s26, 1
      %p86 = por %p84, %p85
      %p87 = scmp.ne.s32.totalorder %s78, %s79
      %p88 = scmp.eq.s32.totalorder %s26, 0
      %p89 = por %p87, %p88
      %p90 = scmp.ne.s32.totalorder %s78, %s79
      %p91 = scmp.eq.s32.totalorder %s27, 1
      %p92 = por %p90, %p91
      %p94 = scmp.ne.s32.totalorder %s79, %s93
      %p95 = scmp.eq.s32.totalorder %s27, 0
      %p96 = por %p94, %p95
      %s98 = sadd.s32 %s97, 1
      %p101 = scmp.eq.s32.totalorder %s21, 1
      %p102 = scmp.ne.s32.totalorder %s97, %s99
      %p103 = scmp.eq.s32.totalorder %s21, 0
      %p104 = por %p102, %p103
      %p105 = scmp.ne.s32.totalorder %s97, %s99
      %p106 = scmp.eq.s32.totalorder %s26, 1
      %p107 = por %p105, %p106
      %p108 = scmp.ne.s32.totalorder %s99, %s100
      %p109 = scmp.eq.s32.totalorder %s26, 0
      %p110 = por %p108, %p109
      %p111 = scmp.ne.s32.totalorder %s99, %s100
      %p112 = scmp.eq.s32.totalorder %s27, 1
      %p113 = por %p111, %p112
      %p115 = scmp.ne.s32.totalorder %s100, %s114
      %p116 = scmp.eq.s32.totalorder %s27, 0
      %p117 = por %p115, %p116
      %s119 = sadd.s32 %s118, 1
      %p122 = scmp.eq.s32.totalorder %s21, 1
      %p123 = scmp.ne.s32.totalorder %s118, %s120
      %p124 = scmp.eq.s32.totalorder %s21, 0
      %p125 = por %p123, %p124
      %p126 = scmp.ne.s32.totalorder %s118, %s120
      %p127 = scmp.eq.s32.totalorder %s26, 1
      %p128 = por %p126, %p127
      %p129 = scmp.ne.s32.totalorder %s120, %s121
      %p130 = scmp.eq.s32.totalorder %s26, 0
      %p131 = por %p129, %p130
      %p132 = scmp.ne.s32.totalorder %s120, %s121
      %p133 = scmp.eq.s32.totalorder %s27, 1
      %p134 = por %p132, %p133
      %p136 = scmp.ne.s32.totalorder %s121, %s135
      %p137 = scmp.eq.s32.totalorder %s27, 0
      %p138 = por %p136, %p137
      %s140 = sadd.s32 %s139, 1
      %p143 = scmp.eq.s32.totalorder %s21, 1
      %p144 = scmp.ne.s32.totalorder %s139, %s141
      %p145 = scmp.eq.s32.totalorder %s21, 0
      %p146 = por %p144, %p145
      %p147 = scmp.ne.s32.totalorder %s139, %s141
      %p148 = scmp.eq.s32.totalorder %s26, 1
      %p149 = por %p147, %p148
      %p150 = scmp.ne.s32.totalorder %s141, %s142
      %p151 = scmp.eq.s32.totalorder %s26, 0
      %p152 = por %p150, %p151
      %p153 = scmp.ne.s32.totalorder %s141, %s142
      %p154 = scmp.eq.s32.totalorder %s27, 1
      %p155 = por %p153, %p154
      %p157 = scmp.ne.s32.totalorder %s142, %s156
      %p158 = scmp.eq.s32.totalorder %s27, 0
      %p159 = por %p157, %p158
      %s161 = sadd.s32 %s160, 1
      %p164 = scmp.eq.s32.totalorder %s21, 1
      %p165 = scmp.ne.s32.totalorder %s160, %s162
      %p166 = scmp.eq.s32.totalorder %s21, 0
      %p167 = por %p165, %p166
      %p168 = scmp.ne.s32.totalorder %s160, %s162
      %p169 = scmp.eq.s32.totalorder %s26, 1
      %p170 = por %p168, %p169
      %p171 = scmp.ne.s32.totalorder %s162, %s163
      %p172 = scmp.eq.s32.totalorder %s26, 0
      %p173 = por %p171, %p172
      %p174 = scmp.ne.s32.totalorder %s162, %s163
      %p175 = scmp.eq.s32.totalorder %s27, 1
      %p176 = por %p174, %p175
      %p178 = scmp.ne.s32.totalorder %s163, %s177
      %p179 = scmp.eq.s32.totalorder %s27, 0
      %p180 = por %p178, %p179
      %s181 = ssub.s32 %s21, %s28
      %p182 = scmp.eq.s32.totalorder %s181, 0
      %s184 = sadd.s32 %s183, 1
      %s185 = scalar_select %p182, %s183, %s184
      %p188 = pneg %p182
      %p189 = scmp.eq.s32.totalorder %s21, 1
      %p190 = por %p188, %p189
      %p191 = scmp.ne.s32.totalorder %s183, %s186
      %p192 = scmp.eq.s32.totalorder %s21, 0
      %p193 = por %p191, %p192
      %p194 = scmp.ne.s32.totalorder %s183, %s186
      %p195 = scmp.eq.s32.totalorder %s26, 1
      %p196 = por %p194, %p195
      %p197 = scmp.ne.s32.totalorder %s186, %s187
      %p198 = scmp.eq.s32.totalorder %s26, 0
      %p199 = por %p197, %p198
      %p200 = scmp.ne.s32.totalorder %s186, %s187
      %p201 = scmp.eq.s32.totalorder %s27, 1
      %p202 = por %p200, %p201
      %p204 = scmp.ne.s32.totalorder %s187, %s203
      %p205 = scmp.eq.s32.totalorder %s27, 0
      %p206 = por %p204, %p205
      %p207 = scmp.le.s32.totalorder 1, %s21
      %p208 = scmp.lt.s32.totalorder %s21, 3
      %p209 = pnand %p207, %p208
      %p210 = pneg %p209
      // Predicated region
      $region9: #{tpu_custom_call.1} parent=5 // pred_check
        _
      $region10: #{tpu_custom_call.1} parent=5 // pred_check_branch
        %212 = sbr.rel (%p209) target = $region12
      $region11: #{tpu_custom_call.1} parent=5 // pred_region
        %s213 = ssub.s32 %s21, 1
        // Predicated region
        $region13: #{tpu_custom_call.1} parent=11 // pred_check
          %p214 = pneg %p68
        $region14: #{tpu_custom_call.1} parent=11 // pred_check_branch
          %216 = sbr.rel (%p214) target = $region16
        $region15: #{tpu_custom_call.1} parent=11 // pred_region
          %s218 = ssub.s32 8192, 8192
          %219 = vsyncadd [#allocation6], %s218
          %s220 = sshll.u32 [#allocation5], 4
          %s221 = int_to_ptr.vmem [resolvable:$true] %s220
          %226 = dma.hbm_to_vmem [thread:$0]  %s1, 8192, %s221, [#allocation6], 128, 128, 8
        $region16: #{tpu_custom_call.1} parent=11 // pred_fallthru
          _
        // Predicated region
        $region17: #{tpu_custom_call.1} parent=11 // pred_check
          %p227 = pneg %p89
        $region18: #{tpu_custom_call.1} parent=11 // pred_check_branch
          %229 = sbr.rel (%p227) target = $region20
        $region19: #{tpu_custom_call.1} parent=11 // pred_region
          _
        $region20: #{tpu_custom_call.1} parent=11 // pred_fallthru
          _
        // Predicated region
        $region21: #{tpu_custom_call.1} parent=11 // pred_check
          %p230 = pneg %p110
        $region22: #{tpu_custom_call.1} parent=11 // pred_check_branch
          %232 = sbr.rel (%p230) target = $region24
        $region23: #{tpu_custom_call.1} parent=11 // pred_region
          %s234 = ssub.s32 4096, 4096
          %235 = vsyncadd [#allocation6], %s234
          %s236 = sshll.u32 [#allocation7], 4
          %s237 = int_to_ptr.vmem [resolvable:$true] %s236
          %242 = dma.hbm_to_vmem [thread:$0]  %s3, 4096, %s237, [#allocation6], 128, 128, 8
        $region24: #{tpu_custom_call.1} parent=11 // pred_fallthru
          _
        // Predicated region
        $region25: #{tpu_custom_call.1} parent=11 // pred_check
          %p243 = pneg %p131
        $region26: #{tpu_custom_call.1} parent=11 // pred_check_branch
          %245 = sbr.rel (%p243) target = $region28
        $region27: #{tpu_custom_call.1} parent=11 // pred_region
          %s247 = ssub.s32 32, 32
          %248 = vsyncadd [#allocation9], %s247
          %s250 = sshll.u32 [#allocation8], 4
          %s251 = int_to_ptr.vmem [resolvable:$true] %s250
          %253 = dma.hbm_to_vmem [thread:$0]  %s4, 32, %s251, [#allocation9]
        $region28: #{tpu_custom_call.1} parent=11 // pred_fallthru
          _
        // Predicated region
        $region29: #{tpu_custom_call.1} parent=11 // pred_check
          %p254 = pneg %p152
        $region30: #{tpu_custom_call.1} parent=11 // pred_check_branch
          %256 = sbr.rel (%p254) target = $region32
        $region31: #{tpu_custom_call.1} parent=11 // pred_region
          %s258 = ssub.s32 8192, 8192
          %259 = vsyncadd [#allocation9], %s258
          %s260 = sshll.u32 [#allocation10], 4
          %s261 = int_to_ptr.vmem [resolvable:$true] %s260
          %266 = dma.hbm_to_vmem [thread:$0]  %s5, 8192, %s261, [#allocation9], 256, 256, 16
        $region32: #{tpu_custom_call.1} parent=11 // pred_fallthru
          _
        // Predicated region
        $region33: #{tpu_custom_call.1} parent=11 // pred_check
          %p267 = pneg %p173
        $region34: #{tpu_custom_call.1} parent=11 // pred_check_branch
          %269 = sbr.rel (%p267) target = $region36
        $region35: #{tpu_custom_call.1} parent=11 // pred_region
          _
        $region36: #{tpu_custom_call.1} parent=11 // pred_fallthru
          _
      $region12: #{tpu_custom_call.1} parent=5 // pred_fallthru
        _
      %p270 = scmp.lt.s32.totalorder %s21, 2
      // Predicated region
      $region37: #{tpu_custom_call.1} parent=5 // pred_check
        %p271 = pneg %p270
      $region38: #{tpu_custom_call.1} parent=5 // pred_check_branch
        %273 = sbr.rel (%p271) target = $region40
      $region39: #{tpu_custom_call.1} parent=5 // pred_region
        // Predicated region
        $region41: #{tpu_custom_call.1} parent=39 // pred_check
          %p274 = pneg %p41
        $region42: #{tpu_custom_call.1} parent=39 // pred_check_branch
          %276 = sbr.rel (%p274) target = $region44
        $region43: #{tpu_custom_call.1} parent=39 // pred_region
          %s277 = sand.u32 %s31, 1
          %s278 = scalar_lea.sflag [#allocation3], %s277
          %s279 = sand.u32 %s31, 1
          %s280 = smul.addr %s279, 512
          %s281 = scalar_lea.vmem [#allocation2], %s280
          %s282 = smul.u32 16, %s21
          %s284 = ssub.s32 8192, 8192
          %285 = vsyncadd %s278, %s284
          %s286 = smul.addr %s282, 4
          %s287 = smul.addr %s286, 128
          %s288 = scalar_lea.hbm %s0, %s287
          %s289 = sshll.u32 %s281, 4
          %s290 = int_to_ptr.vmem [resolvable:$true] %s289
          %295 = dma.hbm_to_vmem [thread:$0]  %s288, 8192, %s290, %s278, 512, 512, 32
        $region44: #{tpu_custom_call.1} parent=39 // pred_fallthru
          _
      $region40: #{tpu_custom_call.1} parent=5 // pred_fallthru
        _
      %p296 = scmp.le.s32.totalorder 1, %s21
      %p297 = scmp.lt.s32.totalorder %s21, 3
      %p298 = pnand %p296, %p297
      %p299 = pneg %p298
      // Predicated region
      $region45: #{tpu_custom_call.1} parent=5 // pred_check
        _
      $region46: #{tpu_custom_call.1} parent=5 // pred_check_branch
        %301 = sbr.rel (%p298) target = $region48
      $region47: #{tpu_custom_call.1} parent=5 // pred_region
        %s302 = ssub.s32 %s21, 1
        %s303 = sand.u32 %s34, 1
        %s304 = scalar_lea.sflag [#allocation3], %s303
        %s305 = sand.u32 %s34, 1
        %s306 = smul.addr %s305, 512
        %s307 = scalar_lea.vmem [#allocation2], %s306
        // Predicated region
        $region49: #{tpu_custom_call.1} parent=47 // pred_check
          %p308 = pneg %p47
        $region50: #{tpu_custom_call.1} parent=47 // pred_check_branch
          %310 = sbr.rel (%p308) target = $region52
        $region51: #{tpu_custom_call.1} parent=47 // pred_region
          %311 = dma.done %s304, 8192
        $region52: #{tpu_custom_call.1} parent=47 // pred_fallthru
          _
        // Predicated region
        $region53: #{tpu_custom_call.1} parent=47 // pred_check
          %p312 = pneg %p68
        $region54: #{tpu_custom_call.1} parent=47 // pred_check_branch
          %314 = sbr.rel (%p312) target = $region56
        $region55: #{tpu_custom_call.1} parent=47 // pred_region
          %315 = dma.done [#allocation6], 8192
        $region56: #{tpu_custom_call.1} parent=47 // pred_fallthru
          _
        // Predicated region
        $region57: #{tpu_custom_call.1} parent=47 // pred_check
          %p316 = pneg %p110
        $region58: #{tpu_custom_call.1} parent=47 // pred_check_branch
          %318 = sbr.rel (%p316) target = $region60
        $region59: #{tpu_custom_call.1} parent=47 // pred_region
          %319 = dma.done [#allocation6], 4096
        $region60: #{tpu_custom_call.1} parent=47 // pred_fallthru
          _
        // Predicated region
        $region61: #{tpu_custom_call.1} parent=47 // pred_check
          %p320 = pneg %p131
        $region62: #{tpu_custom_call.1} parent=47 // pred_check_branch
          %322 = sbr.rel (%p320) target = $region64
        $region63: #{tpu_custom_call.1} parent=47 // pred_region
          %323 = dma.done [#allocation9], 32
        $region64: #{tpu_custom_call.1} parent=47 // pred_fallthru
          _
        // Predicated region
        $region65: #{tpu_custom_call.1} parent=47 // pred_check
          %p324 = pneg %p152
        $region66: #{tpu_custom_call.1} parent=47 // pred_check_branch
          %326 = sbr.rel (%p324) target = $region68
        $region67: #{tpu_custom_call.1} parent=47 // pred_region
          %327 = dma.done [#allocation9], 8192
        $region68: #{tpu_custom_call.1} parent=47 // pred_fallthru
          _
        %s328 = sand.u32 %s34, 1
        %s329 = scalar_lea.sflag [#allocation3], %s328
        %s330 = sand.u32 %s34, 1
        %s331 = smul.addr %s330, 512
        %s332 = scalar_lea.vmem [#allocation2], %s331
        %p333 = pneg %p47
        %p334 = pneg %p44
        %p335 = pneg %p68
        %p336 = pneg %p65
        %p337 = pneg %p89
        %p338 = pneg %p86
        %p339 = pneg %p110
        %p340 = pneg %p107
        %p341 = pneg %p131
        %p342 = pneg %p128
        %p343 = pneg %p152
        %p344 = pneg %p149
        %p345 = pneg %p173
        %p346 = pneg %p170
        %p347 = pneg %p199
        %p348 = pneg %p196
        %s349 = sand.u32 %s186, 1
        %s350 = scalar_lea.sflag [#allocation4], %s349
        %s351 = sand.u32 %s186, 1
        %s352 = smul.addr %s351, 512
        %s353 = scalar_lea.vmem [#allocation11], %s352
        %s354 = smul.u32 16, %s26
        %s355 = smul.u32 16, %s26
        %v356 = vld [vmem:[%s307] sm:$0xff]
        %v357 = vld [vmem:[%s307 + $0x8] sm:$0xff]
        %v358 = vld [vmem:[%s307 + $0x10] sm:$0xff]
        %v359 = vld [vmem:[%s307 + $0x18] sm:$0xff]
        %v360 = vld [vmem:[%s307 + $0x20] sm:$0xff]
        %v361 = vld [vmem:[%s307 + $0x28] sm:$0xff]
        %v362 = vld [vmem:[%s307 + $0x30] sm:$0xff]
        %v363 = vld [vmem:[%s307 + $0x38] sm:$0xff]
        %v364 = vld [vmem:[%s307 + $0x40] sm:$0xff]
        %v365 = vld [vmem:[%s307 + $0x48] sm:$0xff]
        %v366 = vld [vmem:[%s307 + $0x50] sm:$0xff]
        %v367 = vld [vmem:[%s307 + $0x58] sm:$0xff]
        %v368 = vld [vmem:[%s307 + $0x60] sm:$0xff]
        %v369 = vld [vmem:[%s307 + $0x68] sm:$0xff]
        %v370 = vld [vmem:[%s307 + $0x70] sm:$0xff]
        %v371 = vld [vmem:[%s307 + $0x78] sm:$0xff]
        %v372 = vld [vmem:[%s307 + $0x80] sm:$0xff]
        %v373 = vld [vmem:[%s307 + $0x88] sm:$0xff]
        %v374 = vld [vmem:[%s307 + $0x90] sm:$0xff]
        %v375 = vld [vmem:[%s307 + $0x98] sm:$0xff]
        %v376 = vld [vmem:[%s307 + $0xa0] sm:$0xff]
        %v377 = vld [vmem:[%s307 + $0xa8] sm:$0xff]
        %v378 = vld [vmem:[%s307 + $0xb0] sm:$0xff]
        %v379 = vld [vmem:[%s307 + $0xb8] sm:$0xff]
        %v380 = vld [vmem:[%s307 + $0xc0] sm:$0xff]
        %v381 = vld [vmem:[%s307 + $0xc8] sm:$0xff]
        %v382 = vld [vmem:[%s307 + $0xd0] sm:$0xff]
        %v383 = vld [vmem:[%s307 + $0xd8] sm:$0xff]
        %v384 = vld [vmem:[%s307 + $0xe0] sm:$0xff]
        %v385 = vld [vmem:[%s307 + $0xe8] sm:$0xff]
        %v386 = vld [vmem:[%s307 + $0xf0] sm:$0xff]
        %v387 = vld [vmem:[%s307 + $0xf8] sm:$0xff]
        %v388 = vld [vmem:[%s307 + $0x100] sm:$0xff]
        %v389 = vld [vmem:[%s307 + $0x108] sm:$0xff]
        %v390 = vld [vmem:[%s307 + $0x110] sm:$0xff]
        %v391 = vld [vmem:[%s307 + $0x118] sm:$0xff]
        %v392 = vld [vmem:[%s307 + $0x120] sm:$0xff]
        %v393 = vld [vmem:[%s307 + $0x128] sm:$0xff]
        %v394 = vld [vmem:[%s307 + $0x130] sm:$0xff]
        %v395 = vld [vmem:[%s307 + $0x138] sm:$0xff]
        %v396 = vld [vmem:[%s307 + $0x140] sm:$0xff]
        %v397 = vld [vmem:[%s307 + $0x148] sm:$0xff]
        %v398 = vld [vmem:[%s307 + $0x150] sm:$0xff]
        %v399 = vld [vmem:[%s307 + $0x158] sm:$0xff]
        %v400 = vld [vmem:[%s307 + $0x160] sm:$0xff]
        %v401 = vld [vmem:[%s307 + $0x168] sm:$0xff]
        %v402 = vld [vmem:[%s307 + $0x170] sm:$0xff]
        %v403 = vld [vmem:[%s307 + $0x178] sm:$0xff]
        %v404 = vld [vmem:[%s307 + $0x180] sm:$0xff]
        %v405 = vld [vmem:[%s307 + $0x188] sm:$0xff]
        %v406 = vld [vmem:[%s307 + $0x190] sm:$0xff]
        %v407 = vld [vmem:[%s307 + $0x198] sm:$0xff]
        %v408 = vld [vmem:[%s307 + $0x1a0] sm:$0xff]
        %v409 = vld [vmem:[%s307 + $0x1a8] sm:$0xff]
        %v410 = vld [vmem:[%s307 + $0x1b0] sm:$0xff]
        %v411 = vld [vmem:[%s307 + $0x1b8] sm:$0xff]
        %v412 = vld [vmem:[%s307 + $0x1c0] sm:$0xff]
        %v413 = vld [vmem:[%s307 + $0x1c8] sm:$0xff]
        %v414 = vld [vmem:[%s307 + $0x1d0] sm:$0xff]
        %v415 = vld [vmem:[%s307 + $0x1d8] sm:$0xff]
        %v416 = vld [vmem:[%s307 + $0x1e0] sm:$0xff]
        %v417 = vld [vmem:[%s307 + $0x1e8] sm:$0xff]
        %v418 = vld [vmem:[%s307 + $0x1f0] sm:$0xff]
        %v419 = vld [vmem:[%s307 + $0x1f8] sm:$0xff]
        %v420 = vmul.f32 %v356, %v356
        %v421 = vmul.f32 %v357, %v357
        %v422 = vmul.f32 %v358, %v358
        %v423 = vmul.f32 %v359, %v359
        %v424 = vmul.f32 %v360, %v360
        %v425 = vmul.f32 %v361, %v361
        %v426 = vmul.f32 %v362, %v362
        %v427 = vmul.f32 %v363, %v363
        %v428 = vmul.f32 %v364, %v364
        %v429 = vmul.f32 %v365, %v365
        %v430 = vmul.f32 %v366, %v366
        %v431 = vmul.f32 %v367, %v367
        %v432 = vmul.f32 %v368, %v368
        %v433 = vmul.f32 %v369, %v369
        %v434 = vmul.f32 %v370, %v370
        %v435 = vmul.f32 %v371, %v371
        %v436 = vmul.f32 %v372, %v372
        %v437 = vmul.f32 %v373, %v373
        %v438 = vmul.f32 %v374, %v374
        %v439 = vmul.f32 %v375, %v375
        %v440 = vmul.f32 %v376, %v376
        %v441 = vmul.f32 %v377, %v377
        %v442 = vmul.f32 %v378, %v378
        %v443 = vmul.f32 %v379, %v379
        %v444 = vmul.f32 %v380, %v380
        %v445 = vmul.f32 %v381, %v381
        %v446 = vmul.f32 %v382, %v382
        %v447 = vmul.f32 %v383, %v383
        %v448 = vmul.f32 %v384, %v384
        %v449 = vmul.f32 %v385, %v385
        %v450 = vmul.f32 %v386, %v386
        %v451 = vmul.f32 %v387, %v387
        %v452 = vmul.f32 %v388, %v388
        %v453 = vmul.f32 %v389, %v389
        %v454 = vmul.f32 %v390, %v390
        %v455 = vmul.f32 %v391, %v391
        %v456 = vmul.f32 %v392, %v392
        %v457 = vmul.f32 %v393, %v393
        %v458 = vmul.f32 %v394, %v394
        %v459 = vmul.f32 %v395, %v395
        %v460 = vmul.f32 %v396, %v396
        %v461 = vmul.f32 %v397, %v397
        %v462 = vmul.f32 %v398, %v398
        %v463 = vmul.f32 %v399, %v399
        %v464 = vmul.f32 %v400, %v400
        %v465 = vmul.f32 %v401, %v401
        %v466 = vmul.f32 %v402, %v402
        %v467 = vmul.f32 %v403, %v403
        %v468 = vmul.f32 %v404, %v404
        %v469 = vmul.f32 %v405, %v405
        %v470 = vmul.f32 %v406, %v406
        %v471 = vmul.f32 %v407, %v407
        %v472 = vmul.f32 %v408, %v408
        %v473 = vmul.f32 %v409, %v409
        %v474 = vmul.f32 %v410, %v410
        %v475 = vmul.f32 %v411, %v411
        %v476 = vmul.f32 %v412, %v412
        %v477 = vmul.f32 %v413, %v413
        %v478 = vmul.f32 %v414, %v414
        %v479 = vmul.f32 %v415, %v415
        %v480 = vmul.f32 %v416, %v416
        %v481 = vmul.f32 %v417, %v417
        %v482 = vmul.f32 %v418, %v418
        %v483 = vmul.f32 %v419, %v419
        %v484 = vadd.f32 %v420, %v421
        %v485 = vadd.f32 %v484, %v422
        %v486 = vadd.f32 %v485, %v423
        %487 = vadd.xlane.f32.xlu0 %v486
        %v488 = vpop.xlane.xlu0 %487
        %v489 = vadd.f32 %v424, %v425
        %v490 = vadd.f32 %v489, %v426
        %v491 = vadd.f32 %v490, %v427
        %492 = vadd.xlane.f32.xlu0 %v491
        %v493 = vpop.xlane.xlu0 %492
        %v494 = vadd.f32 %v428, %v429
        %v495 = vadd.f32 %v494, %v430
        %v496 = vadd.f32 %v495, %v431
        %497 = vadd.xlane.f32.xlu0 %v496
        %v498 = vpop.xlane.xlu0 %497
        %v499 = vadd.f32 %v432, %v433
        %v500 = vadd.f32 %v499, %v434
        %v501 = vadd.f32 %v500, %v435
        %502 = vadd.xlane.f32.xlu0 %v501
        %v503 = vpop.xlane.xlu0 %502
        %v504 = vadd.f32 %v436, %v437
        %v505 = vadd.f32 %v504, %v438
        %v506 = vadd.f32 %v505, %v439
        %507 = vadd.xlane.f32.xlu0 %v506
        %v508 = vpop.xlane.xlu0 %507
        %v509 = vadd.f32 %v440, %v441
        %v510 = vadd.f32 %v509, %v442
        %v511 = vadd.f32 %v510, %v443
        %512 = vadd.xlane.f32.xlu0 %v511
        %v513 = vpop.xlane.xlu0 %512
        %v514 = vadd.f32 %v444, %v445
        %v515 = vadd.f32 %v514, %v446
        %v516 = vadd.f32 %v515, %v447
        %517 = vadd.xlane.f32.xlu0 %v516
        %v518 = vpop.xlane.xlu0 %517
        %v519 = vadd.f32 %v448, %v449
        %v520 = vadd.f32 %v519, %v450
        %v521 = vadd.f32 %v520, %v451
        %522 = vadd.xlane.f32.xlu0 %v521
        %v523 = vpop.xlane.xlu0 %522
        %v524 = vadd.f32 %v452, %v453
        %v525 = vadd.f32 %v524, %v454
        %v526 = vadd.f32 %v525, %v455
        %527 = vadd.xlane.f32.xlu0 %v526
        %v528 = vpop.xlane.xlu0 %527
        %v529 = vadd.f32 %v456, %v457
        %v530 = vadd.f32 %v529, %v458
        %v531 = vadd.f32 %v530, %v459
        %532 = vadd.xlane.f32.xlu0 %v531
        %v533 = vpop.xlane.xlu0 %532
        %v534 = vadd.f32 %v460, %v461
        %v535 = vadd.f32 %v534, %v462
        %v536 = vadd.f32 %v535, %v463
        %537 = vadd.xlane.f32.xlu0 %v536
        %v538 = vpop.xlane.xlu0 %537
        %v539 = vadd.f32 %v464, %v465
        %v540 = vadd.f32 %v539, %v466
        %v541 = vadd.f32 %v540, %v467
        %542 = vadd.xlane.f32.xlu0 %v541
        %v543 = vpop.xlane.xlu0 %542
        %v544 = vadd.f32 %v468, %v469
        %v545 = vadd.f32 %v544, %v470
        %v546 = vadd.f32 %v545, %v471
        %547 = vadd.xlane.f32.xlu0 %v546
        %v548 = vpop.xlane.xlu0 %547
        %v549 = vadd.f32 %v472, %v473
        %v550 = vadd.f32 %v549, %v474
        %v551 = vadd.f32 %v550, %v475
        %552 = vadd.xlane.f32.xlu0 %v551
        %v553 = vpop.xlane.xlu0 %552
        %v554 = vadd.f32 %v476, %v477
        %v555 = vadd.f32 %v554, %v478
        %v556 = vadd.f32 %v555, %v479
        %557 = vadd.xlane.f32.xlu0 %v556
        %v558 = vpop.xlane.xlu0 %557
        %v559 = vadd.f32 %v480, %v481
        %v560 = vadd.f32 %v559, %v482
        %v561 = vadd.f32 %v560, %v483
        %562 = vadd.xlane.f32.xlu0 %v561
        %v563 = vpop.xlane.xlu0 %562
        %v564 = vmax.f32 %v488, 1e-24
        %v565 = vmax.f32 %v493, 1e-24
        %v566 = vmax.f32 %v498, 1e-24
        %v567 = vmax.f32 %v503, 1e-24
        %v568 = vmax.f32 %v508, 1e-24
        %v569 = vmax.f32 %v513, 1e-24
        %v570 = vmax.f32 %v518, 1e-24
        %v571 = vmax.f32 %v523, 1e-24
        %v572 = vmax.f32 %v528, 1e-24
        %v573 = vmax.f32 %v533, 1e-24
        %v574 = vmax.f32 %v538, 1e-24
        %v575 = vmax.f32 %v543, 1e-24
        %v576 = vmax.f32 %v548, 1e-24
        %v577 = vmax.f32 %v553, 1e-24
        %v578 = vmax.f32 %v558, 1e-24
        %v579 = vmax.f32 %v563, 1e-24
        %v580 = vrsqrt.pop %v564
        %v581 = vrsqrt.pop %v565
        %v582 = vrsqrt.pop %v566
        %v583 = vrsqrt.pop %v567
        %v584 = vrsqrt.pop %v568
        %v585 = vrsqrt.pop %v569
        %v586 = vrsqrt.pop %v570
        %v587 = vrsqrt.pop %v571
        %v588 = vrsqrt.pop %v572
        %v589 = vrsqrt.pop %v573
        %v590 = vrsqrt.pop %v574
        %v591 = vrsqrt.pop %v575
        %v592 = vrsqrt.pop %v576
        %v593 = vrsqrt.pop %v577
        %v594 = vrsqrt.pop %v578
        %v595 = vrsqrt.pop %v579
        %v596 = vpack.c.bf16 %v360, %v356
        %v597 = vpack.c.bf16 %v361, %v357
        %v598 = vpack.c.bf16 %v362, %v358
        %v599 = vpack.c.bf16 %v363, %v359
        %v600 = vpack.c.bf16 %v368, %v364
        %v601 = vpack.c.bf16 %v369, %v365
        %v602 = vpack.c.bf16 %v370, %v366
        %v603 = vpack.c.bf16 %v371, %v367
        %v604 = vpack.c.bf16 %v376, %v372
        %v605 = vpack.c.bf16 %v377, %v373
        %v606 = vpack.c.bf16 %v378, %v374
        %v607 = vpack.c.bf16 %v379, %v375
        %v608 = vpack.c.bf16 %v384, %v380
        %v609 = vpack.c.bf16 %v385, %v381
        %v610 = vpack.c.bf16 %v386, %v382
        %v611 = vpack.c.bf16 %v387, %v383
        %v612 = vpack.c.bf16 %v392, %v388
        %v613 = vpack.c.bf16 %v393, %v389
        %v614 = vpack.c.bf16 %v394, %v390
        %v615 = vpack.c.bf16 %v395, %v391
        %v616 = vpack.c.bf16 %v400, %v396
        %v617 = vpack.c.bf16 %v401, %v397
        %v618 = vpack.c.bf16 %v402, %v398
        %v619 = vpack.c.bf16 %v403, %v399
        %v620 = vpack.c.bf16 %v408, %v404
        %v621 = vpack.c.bf16 %v409, %v405
        %v622 = vpack.c.bf16 %v410, %v406
        %v623 = vpack.c.bf16 %v411, %v407
        %v624 = vpack.c.bf16 %v416, %v412
        %v625 = vpack.c.bf16 %v417, %v413
        %v626 = vpack.c.bf16 %v418, %v414
        %v627 = vpack.c.bf16 %v419, %v415
        %v628 = vld [vmem:[#allocation5] sm:$0xff]
        %v629 = vld [vmem:[#allocation5 + $0x8] sm:$0xff]
        %v630 = vld [vmem:[#allocation5 + $0x10] sm:$0xff]
        %v631 = vld [vmem:[#allocation5 + $0x18] sm:$0xff]
        %v632 = vld [vmem:[#allocation5 + $0x20] sm:$0xff]
        %v633 = vld [vmem:[#allocation5 + $0x28] sm:$0xff]
        %v634 = vld [vmem:[#allocation5 + $0x30] sm:$0xff]
        %v635 = vld [vmem:[#allocation5 + $0x38] sm:$0xff]
        %v636 = vld [vmem:[#allocation5 + $0x40] sm:$0xff]
        %v637 = vld [vmem:[#allocation5 + $0x48] sm:$0xff]
        %v638 = vld [vmem:[#allocation5 + $0x50] sm:$0xff]
        %v639 = vld [vmem:[#allocation5 + $0x58] sm:$0xff]
        %v640 = vld [vmem:[#allocation5 + $0x60] sm:$0xff]
        %v641 = vld [vmem:[#allocation5 + $0x68] sm:$0xff]
        %v642 = vld [vmem:[#allocation5 + $0x70] sm:$0xff]
        %v643 = vld [vmem:[#allocation5 + $0x78] sm:$0xff]
        %v644 = vld [vmem:[#allocation5 + $0x80] sm:$0xff]
        %v645 = vld [vmem:[#allocation5 + $0x88] sm:$0xff]
        %v646 = vld [vmem:[#allocation5 + $0x90] sm:$0xff]
        %v647 = vld [vmem:[#allocation5 + $0x98] sm:$0xff]
        %v648 = vld [vmem:[#allocation5 + $0xa0] sm:$0xff]
        %v649 = vld [vmem:[#allocation5 + $0xa8] sm:$0xff]
        %v650 = vld [vmem:[#allocation5 + $0xb0] sm:$0xff]
        %v651 = vld [vmem:[#allocation5 + $0xb8] sm:$0xff]
        %v652 = vld [vmem:[#allocation5 + $0xc0] sm:$0xff]
        %v653 = vld [vmem:[#allocation5 + $0xc8] sm:$0xff]
        %v654 = vld [vmem:[#allocation5 + $0xd0] sm:$0xff]
        %v655 = vld [vmem:[#allocation5 + $0xd8] sm:$0xff]
        %v656 = vld [vmem:[#allocation5 + $0xe0] sm:$0xff]
        %v657 = vld [vmem:[#allocation5 + $0xe8] sm:$0xff]
        %v658 = vld [vmem:[#allocation5 + $0xf0] sm:$0xff]
        %v659 = vld [vmem:[#allocation5 + $0xf8] sm:$0xff]
        %v660 = vld [vmem:[#allocation5 + $0x100] sm:$0xff]
        %v661 = vld [vmem:[#allocation5 + $0x108] sm:$0xff]
        %v662 = vld [vmem:[#allocation5 + $0x110] sm:$0xff]
        %v663 = vld [vmem:[#allocation5 + $0x118] sm:$0xff]
        %v664 = vld [vmem:[#allocation5 + $0x120] sm:$0xff]
        %v665 = vld [vmem:[#allocation5 + $0x128] sm:$0xff]
        %v666 = vld [vmem:[#allocation5 + $0x130] sm:$0xff]
        %v667 = vld [vmem:[#allocation5 + $0x138] sm:$0xff]
        %v668 = vld [vmem:[#allocation5 + $0x140] sm:$0xff]
        %v669 = vld [vmem:[#allocation5 + $0x148] sm:$0xff]
        %v670 = vld [vmem:[#allocation5 + $0x150] sm:$0xff]
        %v671 = vld [vmem:[#allocation5 + $0x158] sm:$0xff]
        %v672 = vld [vmem:[#allocation5 + $0x160] sm:$0xff]
        %v673 = vld [vmem:[#allocation5 + $0x168] sm:$0xff]
        %v674 = vld [vmem:[#allocation5 + $0x170] sm:$0xff]
        %v675 = vld [vmem:[#allocation5 + $0x178] sm:$0xff]
        %v676 = vld [vmem:[#allocation5 + $0x180] sm:$0xff]
        %v677 = vld [vmem:[#allocation5 + $0x188] sm:$0xff]
        %v678 = vld [vmem:[#allocation5 + $0x190] sm:$0xff]
        %v679 = vld [vmem:[#allocation5 + $0x198] sm:$0xff]
        %v680 = vld [vmem:[#allocation5 + $0x1a0] sm:$0xff]
        %v681 = vld [vmem:[#allocation5 + $0x1a8] sm:$0xff]
        %v682 = vld [vmem:[#allocation5 + $0x1b0] sm:$0xff]
        %v683 = vld [vmem:[#allocation5 + $0x1b8] sm:$0xff]
        %v684 = vld [vmem:[#allocation5 + $0x1c0] sm:$0xff]
        %v685 = vld [vmem:[#allocation5 + $0x1c8] sm:$0xff]
        %v686 = vld [vmem:[#allocation5 + $0x1d0] sm:$0xff]
        %v687 = vld [vmem:[#allocation5 + $0x1d8] sm:$0xff]
        %v688 = vld [vmem:[#allocation5 + $0x1e0] sm:$0xff]
        %v689 = vld [vmem:[#allocation5 + $0x1e8] sm:$0xff]
        %v690 = vld [vmem:[#allocation5 + $0x1f0] sm:$0xff]
        %v691 = vld [vmem:[#allocation5 + $0x1f8] sm:$0xff]
        %v756 = vunpack.c.l.b16 %v628
        %v757 = vunpack.c.h.b16 %v628
        %v758 = vunpack.c.l.b16 %v629
        %v759 = vunpack.c.h.b16 %v629
        %v760 = vunpack.c.l.b16 %v630
        %v761 = vunpack.c.h.b16 %v630
        %v762 = vunpack.c.l.b16 %v631
        %v763 = vunpack.c.h.b16 %v631
        %v764 = vunpack.c.l.b16 %v632
        %v765 = vunpack.c.h.b16 %v632
        %v766 = vunpack.c.l.b16 %v633
        %v767 = vunpack.c.h.b16 %v633
        %v768 = vunpack.c.l.b16 %v634
        %v769 = vunpack.c.h.b16 %v634
        %v770 = vunpack.c.l.b16 %v635
        %v771 = vunpack.c.h.b16 %v635
        %v772 = vunpack.c.l.b16 %v636
        %v773 = vunpack.c.h.b16 %v636
        %v774 = vunpack.c.l.b16 %v637
        %v775 = vunpack.c.h.b16 %v637
        %v776 = vunpack.c.l.b16 %v638
        %v777 = vunpack.c.h.b16 %v638
        %v778 = vunpack.c.l.b16 %v639
        %v779 = vunpack.c.h.b16 %v639
        %v780 = vunpack.c.l.b16 %v640
        %v781 = vunpack.c.h.b16 %v640
        %v782 = vunpack.c.l.b16 %v641
        %v783 = vunpack.c.h.b16 %v641
        %v784 = vunpack.c.l.b16 %v642
        %v785 = vunpack.c.h.b16 %v642
        %v786 = vunpack.c.l.b16 %v643
        %v787 = vunpack.c.h.b16 %v643
        %v788 = vunpack.c.l.b16 %v644
        %v789 = vunpack.c.h.b16 %v644
        %v790 = vunpack.c.l.b16 %v645
        %v791 = vunpack.c.h.b16 %v645
        %v792 = vunpack.c.l.b16 %v646
        %v793 = vunpack.c.h.b16 %v646
        %v794 = vunpack.c.l.b16 %v647
        %v795 = vunpack.c.h.b16 %v647
        %v796 = vunpack.c.l.b16 %v648
        %v797 = vunpack.c.h.b16 %v648
        %v798 = vunpack.c.l.b16 %v649
        %v799 = vunpack.c.h.b16 %v649
        %v800 = vunpack.c.l.b16 %v650
        %v801 = vunpack.c.h.b16 %v650
        %v802 = vunpack.c.l.b16 %v651
        %v803 = vunpack.c.h.b16 %v651
        %v804 = vunpack.c.l.b16 %v652
        %v805 = vunpack.c.h.b16 %v652
        %v806 = vunpack.c.l.b16 %v653
        %v807 = vunpack.c.h.b16 %v653
        %v808 = vunpack.c.l.b16 %v654
        %v809 = vunpack.c.h.b16 %v654
        %v810 = vunpack.c.l.b16 %v655
        %v811 = vunpack.c.h.b16 %v655
        %v812 = vunpack.c.l.b16 %v656
        %v813 = vunpack.c.h.b16 %v656
        %v814 = vunpack.c.l.b16 %v657
        %v815 = vunpack.c.h.b16 %v657
        %v816 = vunpack.c.l.b16 %v658
        %v817 = vunpack.c.h.b16 %v658
        %v818 = vunpack.c.l.b16 %v659
        %v819 = vunpack.c.h.b16 %v659
        %v820 = vunpack.c.l.b16 %v660
        %v821 = vunpack.c.h.b16 %v660
        %v822 = vunpack.c.l.b16 %v661
        %v823 = vunpack.c.h.b16 %v661
        %v824 = vunpack.c.l.b16 %v662
        %v825 = vunpack.c.h.b16 %v662
        %v826 = vunpack.c.l.b16 %v663
        %v827 = vunpack.c.h.b16 %v663
        %v828 = vunpack.c.l.b16 %v664
        %v829 = vunpack.c.h.b16 %v664
        %v830 = vunpack.c.l.b16 %v665
        %v831 = vunpack.c.h.b16 %v665
        %v832 = vunpack.c.l.b16 %v666
        %v833 = vunpack.c.h.b16 %v666
        %v834 = vunpack.c.l.b16 %v667
        %v835 = vunpack.c.h.b16 %v667
        %v836 = vunpack.c.l.b16 %v668
        %v837 = vunpack.c.h.b16 %v668
        %v838 = vunpack.c.l.b16 %v669
        %v839 = vunpack.c.h.b16 %v669
        %v840 = vunpack.c.l.b16 %v670
        %v841 = vunpack.c.h.b16 %v670
        %v842 = vunpack.c.l.b16 %v671
        %v843 = vunpack.c.h.b16 %v671
        %v844 = vunpack.c.l.b16 %v672
        %v845 = vunpack.c.h.b16 %v672
        %v846 = vunpack.c.l.b16 %v673
        %v847 = vunpack.c.h.b16 %v673
        %v848 = vunpack.c.l.b16 %v674
        %v849 = vunpack.c.h.b16 %v674
        %v850 = vunpack.c.l.b16 %v675
        %v851 = vunpack.c.h.b16 %v675
        %v852 = vunpack.c.l.b16 %v676
        %v853 = vunpack.c.h.b16 %v676
        %v854 = vunpack.c.l.b16 %v677
        %v855 = vunpack.c.h.b16 %v677
        %v856 = vunpack.c.l.b16 %v678
        %v857 = vunpack.c.h.b16 %v678
        %v858 = vunpack.c.l.b16 %v679
        %v859 = vunpack.c.h.b16 %v679
        %v860 = vunpack.c.l.b16 %v680
        %v861 = vunpack.c.h.b16 %v680
        %v862 = vunpack.c.l.b16 %v681
        %v863 = vunpack.c.h.b16 %v681
        %v864 = vunpack.c.l.b16 %v682
        %v865 = vunpack.c.h.b16 %v682
        %v866 = vunpack.c.l.b16 %v683
        %v867 = vunpack.c.h.b16 %v683
        %v868 = vunpack.c.l.b16 %v684
        %v869 = vunpack.c.h.b16 %v684
        %v870 = vunpack.c.l.b16 %v685
        %v871 = vunpack.c.h.b16 %v685
        %v872 = vunpack.c.l.b16 %v686
        %v873 = vunpack.c.h.b16 %v686
        %v874 = vunpack.c.l.b16 %v687
        %v875 = vunpack.c.h.b16 %v687
        %v876 = vunpack.c.l.b16 %v688
        %v877 = vunpack.c.h.b16 %v688
        %v878 = vunpack.c.l.b16 %v689
        %v879 = vunpack.c.h.b16 %v689
        %v880 = vunpack.c.l.b16 %v690
        %v881 = vunpack.c.h.b16 %v690
        %v882 = vunpack.c.l.b16 %v691
        %v883 = vunpack.c.h.b16 %v691
        %v884 = vpack.c.b16 %v758, %v756
        %v885 = vpack.c.b16 %v759, %v757
        %v886 = vpack.c.b16 %v762, %v760
        %v887 = vpack.c.b16 %v763, %v761
        %v888 = vpack.c.b16 %v766, %v764
        %v889 = vpack.c.b16 %v767, %v765
        %v890 = vpack.c.b16 %v770, %v768
        %v891 = vpack.c.b16 %v771, %v769
        %v892 = vpack.c.b16 %v774, %v772
        %v893 = vpack.c.b16 %v775, %v773
        %v894 = vpack.c.b16 %v778, %v776
        %v895 = vpack.c.b16 %v779, %v777
        %v896 = vpack.c.b16 %v782, %v780
        %v897 = vpack.c.b16 %v783, %v781
        %v898 = vpack.c.b16 %v786, %v784
        %v899 = vpack.c.b16 %v787, %v785
        %v900 = vpack.c.b16 %v790, %v788
        %v901 = vpack.c.b16 %v791, %v789
        %v902 = vpack.c.b16 %v794, %v792
        %v903 = vpack.c.b16 %v795, %v793
        %v904 = vpack.c.b16 %v798, %v796
        %v905 = vpack.c.b16 %v799, %v797
        %v906 = vpack.c.b16 %v802, %v800
        %v907 = vpack.c.b16 %v803, %v801
        %v908 = vpack.c.b16 %v806, %v804
        %v909 = vpack.c.b16 %v807, %v805
        %v910 = vpack.c.b16 %v810, %v808
        %v911 = vpack.c.b16 %v811, %v809
        %v912 = vpack.c.b16 %v814, %v812
        %v913 = vpack.c.b16 %v815, %v813
        %v914 = vpack.c.b16 %v818, %v816
        %v915 = vpack.c.b16 %v819, %v817
        %v916 = vpack.c.b16 %v822, %v820
        %v917 = vpack.c.b16 %v823, %v821
        %v918 = vpack.c.b16 %v826, %v824
        %v919 = vpack.c.b16 %v827, %v825
        %v920 = vpack.c.b16 %v830, %v828
        %v921 = vpack.c.b16 %v831, %v829
        %v922 = vpack.c.b16 %v834, %v832
        %v923 = vpack.c.b16 %v835, %v833
        %v924 = vpack.c.b16 %v838, %v836
        %v925 = vpack.c.b16 %v839, %v837
        %v926 = vpack.c.b16 %v842, %v840
        %v927 = vpack.c.b16 %v843, %v841
        %v928 = vpack.c.b16 %v846, %v844
        %v929 = vpack.c.b16 %v847, %v845
        %v930 = vpack.c.b16 %v850, %v848
        %v931 = vpack.c.b16 %v851, %v849
        %v932 = vpack.c.b16 %v854, %v852
        %v933 = vpack.c.b16 %v855, %v853
        %v934 = vpack.c.b16 %v858, %v856
        %v935 = vpack.c.b16 %v859, %v857
        %v936 = vpack.c.b16 %v862, %v860
        %v937 = vpack.c.b16 %v863, %v861
        %v938 = vpack.c.b16 %v866, %v864
        %v939 = vpack.c.b16 %v867, %v865
        %v940 = vpack.c.b16 %v870, %v868
        %v941 = vpack.c.b16 %v871, %v869
        %v942 = vpack.c.b16 %v874, %v872
        %v943 = vpack.c.b16 %v875, %v873
        %v944 = vpack.c.b16 %v878, %v876
        %v945 = vpack.c.b16 %v879, %v877
        %v946 = vpack.c.b16 %v882, %v880
        %v947 = vpack.c.b16 %v883, %v881
        %1012 = vmatprep.subr.bf16.mxu0 %v899
        %1013 = vmatpush1.bf16.msra.mxu0 %v898
        %1014 = vmatprep.subr.bf16.mxu0 %v897
        %1015 = vmatpush1.bf16.msra.mxu0 %v896
        %1016 = vmatprep.subr.bf16.mxu0 %v895
        %1017 = vmatpush1.bf16.msra.mxu0 %v894
        %1018 = vmatprep.subr.bf16.mxu0 %v893
        %1019 = vmatpush1.bf16.msra.mxu0 %v892
        %1020 = vmatprep.subr.bf16.mxu0 %v891
        %1021 = vmatpush1.bf16.msra.mxu0 %v890
        %1022 = vmatprep.subr.bf16.mxu0 %v889
        %1023 = vmatpush1.bf16.msra.mxu0 %v888
        %1024 = vmatprep.subr.bf16.mxu0 %v887
        %1025 = vmatpush1.bf16.msra.mxu0 %v886
        %1026 = vmatprep.subr.bf16.mxu0 %v885
        %1027 = vmatpush1.bf16.msra.mxu0 %v884
        %1028 = vmatprep.subr.bf16.mxu0 %v915
        %1029 = vmatpush2.bf16.msra.mxu0 %v914
        %1030 = vmatprep.subr.bf16.mxu0 %v913
        %1031 = vmatpush2.bf16.msra.mxu0 %v912
        %1032 = vmatprep.subr.bf16.mxu0 %v911
        %1033 = vmatpush2.bf16.msra.mxu0 %v910
        %1034 = vmatprep.subr.bf16.mxu0 %v909
        %1035 = vmatpush2.bf16.msra.mxu0 %v908
        %1036 = vmatprep.subr.bf16.mxu0 %v907
        %1037 = vmatpush2.bf16.msra.mxu0 %v906
        %1038 = vmatprep.subr.bf16.mxu0 %v905
        %1039 = vmatpush2.bf16.msra.mxu0 %v904
        %1040 = vmatprep.subr.bf16.mxu0 %v903
        %1041 = vmatpush2.bf16.msra.mxu0 %v902
        %1042 = vmatprep.subr.bf16.mxu0 %v901
        %1043 = vmatpush2.bf16.msra.mxu0 %v900
        %1044 = vmatprep.mubr.bf16.mxu0 %v597
        %1045 = vmatmul.mubr.bf16.gmra.mxu0 %v596
        %v1046 = vpop.f32.mrf.mxu0
        %v1047 = vadd.f32 0.0, %v1046
        %v1048 = vpop.f32.mrf.mxu0
        %v1049 = vadd.f32 0.0, %v1048
        %v1050 = vpop.f32.mrf.mxu0
        %v1051 = vadd.f32 0.0, %v1050
        %v1052 = vpop.f32.mrf.mxu0
        %v1053 = vadd.f32 0.0, %v1052
        %1054 = vmatprep.mubr.bf16.mxu0 %v601
        %1055 = vmatmul.mubr.bf16.gmra.mxu0 %v600
        %v1056 = vpop.f32.mrf.mxu0
        %v1057 = vadd.f32 0.0, %v1056
        %v1058 = vpop.f32.mrf.mxu0
        %v1059 = vadd.f32 0.0, %v1058
        %v1060 = vpop.f32.mrf.mxu0
        %v1061 = vadd.f32 0.0, %v1060
        %v1062 = vpop.f32.mrf.mxu0
        %v1063 = vadd.f32 0.0, %v1062
        %1064 = vmatprep.mubr.bf16.mxu0 %v605
        %1065 = vmatmul.mubr.bf16.gmra.mxu0 %v604
        %v1066 = vpop.f32.mrf.mxu0
        %v1067 = vadd.f32 0.0, %v1066
        %v1068 = vpop.f32.mrf.mxu0
        %v1069 = vadd.f32 0.0, %v1068
        %v1070 = vpop.f32.mrf.mxu0
        %v1071 = vadd.f32 0.0, %v1070
        %v1072 = vpop.f32.mrf.mxu0
        %v1073 = vadd.f32 0.0, %v1072
        %1074 = vmatprep.mubr.bf16.mxu0 %v609
        %1075 = vmatmul.mubr.bf16.gmra.mxu0 %v608
        %v1076 = vpop.f32.mrf.mxu0
        %v1077 = vadd.f32 0.0, %v1076
        %v1078 = vpop.f32.mrf.mxu0
        %v1079 = vadd.f32 0.0, %v1078
        %v1080 = vpop.f32.mrf.mxu0
        %v1081 = vadd.f32 0.0, %v1080
        %v1082 = vpop.f32.mrf.mxu0
        %v1083 = vadd.f32 0.0, %v1082
        %1084 = vmatprep.mubr.bf16.mxu0 %v613
        %1085 = vmatmul.mubr.bf16.gmra.mxu0 %v612
        %v1086 = vpop.f32.mrf.mxu0
        %v1087 = vadd.f32 0.0, %v1086
        %v1088 = vpop.f32.mrf.mxu0
        %v1089 = vadd.f32 0.0, %v1088
        %v1090 = vpop.f32.mrf.mxu0
        %v1091 = vadd.f32 0.0, %v1090
        %v1092 = vpop.f32.mrf.mxu0
        %v1093 = vadd.f32 0.0, %v1092
        %1094 = vmatprep.mubr.bf16.mxu0 %v617
        %1095 = vmatmul.mubr.bf16.gmra.mxu0 %v616
        %v1096 = vpop.f32.mrf.mxu0
        %v1097 = vadd.f32 0.0, %v1096
        %v1098 = vpop.f32.mrf.mxu0
        %v1099 = vadd.f32 0.0, %v1098
        %v1100 = vpop.f32.mrf.mxu0
        %v1101 = vadd.f32 0.0, %v1100
        %v1102 = vpop.f32.mrf.mxu0
        %v1103 = vadd.f32 0.0, %v1102
        %1104 = vmatprep.mubr.bf16.mxu0 %v621
        %1105 = vmatmul.mubr.bf16.gmra.mxu0 %v620
        %v1106 = vpop.f32.mrf.mxu0
        %v1107 = vadd.f32 0.0, %v1106
        %v1108 = vpop.f32.mrf.mxu0
        %v1109 = vadd.f32 0.0, %v1108
        %v1110 = vpop.f32.mrf.mxu0
        %v1111 = vadd.f32 0.0, %v1110
        %v1112 = vpop.f32.mrf.mxu0
        %v1113 = vadd.f32 0.0, %v1112
        %1114 = vmatprep.mubr.bf16.mxu0 %v625
        %1115 = vmatmul.mubr.bf16.gmra.mxu0 %v624
        %v1116 = vpop.f32.mrf.mxu0
        %v1117 = vadd.f32 0.0, %v1116
        %v1118 = vpop.f32.mrf.mxu0
        %v1119 = vadd.f32 0.0, %v1118
        %v1120 = vpop.f32.mrf.mxu0
        %v1121 = vadd.f32 0.0, %v1120
        %v1122 = vpop.f32.mrf.mxu0
        %v1123 = vadd.f32 0.0, %v1122
        %1124 = vdwg.mxu0
        %1125 = vmatprep.subr.bf16.mxu0 %v931
        %1126 = vmatpush1.bf16.msra.mxu0 %v930
        %1127 = vmatprep.subr.bf16.mxu0 %v929
        %1128 = vmatpush1.bf16.msra.mxu0 %v928
        %1129 = vmatprep.subr.bf16.mxu0 %v927
        %1130 = vmatpush1.bf16.msra.mxu0 %v926
        %1131 = vmatprep.subr.bf16.mxu0 %v925
        %1132 = vmatpush1.bf16.msra.mxu0 %v924
        %1133 = vmatprep.subr.bf16.mxu0 %v923
        %1134 = vmatpush1.bf16.msra.mxu0 %v922
        %1135 = vmatprep.subr.bf16.mxu0 %v921
        %1136 = vmatpush1.bf16.msra.mxu0 %v920
        %1137 = vmatprep.subr.bf16.mxu0 %v919
        %1138 = vmatpush1.bf16.msra.mxu0 %v918
        %1139 = vmatprep.subr.bf16.mxu0 %v917
        %1140 = vmatpush1.bf16.msra.mxu0 %v916
        %1141 = vmatprep.subr.bf16.mxu0 %v947
        %1142 = vmatpush2.bf16.msra.mxu0 %v946
        %1143 = vmatprep.subr.bf16.mxu0 %v945
        %1144 = vmatpush2.bf16.msra.mxu0 %v944
        %1145 = vmatprep.subr.bf16.mxu0 %v943
        %1146 = vmatpush2.bf16.msra.mxu0 %v942
        %1147 = vmatprep.subr.bf16.mxu0 %v941
        %1148 = vmatpush2.bf16.msra.mxu0 %v940
        %1149 = vmatprep.subr.bf16.mxu0 %v939
        %1150 = vmatpush2.bf16.msra.mxu0 %v938
        %1151 = vmatprep.subr.bf16.mxu0 %v937
        %1152 = vmatpush2.bf16.msra.mxu0 %v936
        %1153 = vmatprep.subr.bf16.mxu0 %v935
        %1154 = vmatpush2.bf16.msra.mxu0 %v934
        %1155 = vmatprep.subr.bf16.mxu0 %v933
        %1156 = vmatpush2.bf16.msra.mxu0 %v932
        %1157 = vmatprep.mubr.bf16.mxu0 %v599
        %1158 = vmatmul.mubr.bf16.gmra.mxu0 %v598
        %v1159 = vpop.f32.mrf.mxu0
        %v1160 = vadd.f32 %v1047, %v1159
        %v1161 = vpop.f32.mrf.mxu0
        %v1162 = vadd.f32 %v1049, %v1161
        %v1163 = vpop.f32.mrf.mxu0
        %v1164 = vadd.f32 %v1051, %v1163
        %v1165 = vpop.f32.mrf.mxu0
        %v1166 = vadd.f32 %v1053, %v1165
        %1167 = vmatprep.mubr.bf16.mxu0 %v603
        %1168 = vmatmul.mubr.bf16.gmra.mxu0 %v602
        %v1169 = vpop.f32.mrf.mxu0
        %v1170 = vadd.f32 %v1057, %v1169
        %v1171 = vpop.f32.mrf.mxu0
        %v1172 = vadd.f32 %v1059, %v1171
        %v1173 = vpop.f32.mrf.mxu0
        %v1174 = vadd.f32 %v1061, %v1173
        %v1175 = vpop.f32.mrf.mxu0
        %v1176 = vadd.f32 %v1063, %v1175
        %1177 = vmatprep.mubr.bf16.mxu0 %v607
        %1178 = vmatmul.mubr.bf16.gmra.mxu0 %v606
        %v1179 = vpop.f32.mrf.mxu0
        %v1180 = vadd.f32 %v1067, %v1179
        %v1181 = vpop.f32.mrf.mxu0
        %v1182 = vadd.f32 %v1069, %v1181
        %v1183 = vpop.f32.mrf.mxu0
        %v1184 = vadd.f32 %v1071, %v1183
        %v1185 = vpop.f32.mrf.mxu0
        %v1186 = vadd.f32 %v1073, %v1185
        %1187 = vmatprep.mubr.bf16.mxu0 %v611
        %1188 = vmatmul.mubr.bf16.gmra.mxu0 %v610
        %v1189 = vpop.f32.mrf.mxu0
        %v1190 = vadd.f32 %v1077, %v1189
        %v1191 = vpop.f32.mrf.mxu0
        %v1192 = vadd.f32 %v1079, %v1191
        %v1193 = vpop.f32.mrf.mxu0
        %v1194 = vadd.f32 %v1081, %v1193
        %v1195 = vpop.f32.mrf.mxu0
        %v1196 = vadd.f32 %v1083, %v1195
        %1197 = vmatprep.mubr.bf16.mxu0 %v615
        %1198 = vmatmul.mubr.bf16.gmra.mxu0 %v614
        %v1199 = vpop.f32.mrf.mxu0
        %v1200 = vadd.f32 %v1087, %v1199
        %v1201 = vpop.f32.mrf.mxu0
        %v1202 = vadd.f32 %v1089, %v1201
        %v1203 = vpop.f32.mrf.mxu0
        %v1204 = vadd.f32 %v1091, %v1203
        %v1205 = vpop.f32.mrf.mxu0
        %v1206 = vadd.f32 %v1093, %v1205
        %1207 = vmatprep.mubr.bf16.mxu0 %v619
        %1208 = vmatmul.mubr.bf16.gmra.mxu0 %v618
        %v1209 = vpop.f32.mrf.mxu0
        %v1210 = vadd.f32 %v1097, %v1209
        %v1211 = vpop.f32.mrf.mxu0
        %v1212 = vadd.f32 %v1099, %v1211
        %v1213 = vpop.f32.mrf.mxu0
        %v1214 = vadd.f32 %v1101, %v1213
        %v1215 = vpop.f32.mrf.mxu0
        %v1216 = vadd.f32 %v1103, %v1215
        %1217 = vmatprep.mubr.bf16.mxu0 %v623
        %1218 = vmatmul.mubr.bf16.gmra.mxu0 %v622
        %v1219 = vpop.f32.mrf.mxu0
        %v1220 = vadd.f32 %v1107, %v1219
        %v1221 = vpop.f32.mrf.mxu0
        %v1222 = vadd.f32 %v1109, %v1221
        %v1223 = vpop.f32.mrf.mxu0
        %v1224 = vadd.f32 %v1111, %v1223
        %v1225 = vpop.f32.mrf.mxu0
        %v1226 = vadd.f32 %v1113, %v1225
        %1227 = vmatprep.mubr.bf16.mxu0 %v627
        %1228 = vmatmul.mubr.bf16.gmra.mxu0 %v626
        %v1229 = vpop.f32.mrf.mxu0
        %v1230 = vadd.f32 %v1117, %v1229
        %v1231 = vpop.f32.mrf.mxu0
        %v1232 = vadd.f32 %v1119, %v1231
        %v1233 = vpop.f32.mrf.mxu0
        %v1234 = vadd.f32 %v1121, %v1233
        %v1235 = vpop.f32.mrf.mxu0
        %v1236 = vadd.f32 %v1123, %v1235
        %1237 = vdwg.mxu0
        %v1238 = vmul.f32 %v1160, %v580
        %v1239 = vmul.f32 %v1162, %v580
        %v1240 = vmul.f32 %v1164, %v581
        %v1241 = vmul.f32 %v1166, %v581
        %v1242 = vmul.f32 %v1170, %v582
        %v1243 = vmul.f32 %v1172, %v582
        %v1244 = vmul.f32 %v1174, %v583
        %v1245 = vmul.f32 %v1176, %v583
        %v1246 = vmul.f32 %v1180, %v584
        %v1247 = vmul.f32 %v1182, %v584
        %v1248 = vmul.f32 %v1184, %v585
        %v1249 = vmul.f32 %v1186, %v585
        %v1250 = vmul.f32 %v1190, %v586
        %v1251 = vmul.f32 %v1192, %v586
        %v1252 = vmul.f32 %v1194, %v587
        %v1253 = vmul.f32 %v1196, %v587
        %v1254 = vmul.f32 %v1200, %v588
        %v1255 = vmul.f32 %v1202, %v588
        %v1256 = vmul.f32 %v1204, %v589
        %v1257 = vmul.f32 %v1206, %v589
        %v1258 = vmul.f32 %v1210, %v590
        %v1259 = vmul.f32 %v1212, %v590
        %v1260 = vmul.f32 %v1214, %v591
        %v1261 = vmul.f32 %v1216, %v591
        %v1262 = vmul.f32 %v1220, %v592
        %v1263 = vmul.f32 %v1222, %v592
        %v1264 = vmul.f32 %v1224, %v593
        %v1265 = vmul.f32 %v1226, %v593
        %v1266 = vmul.f32 %v1230, %v594
        %v1267 = vmul.f32 %v1232, %v594
        %v1268 = vmul.f32 %v1234, %v595
        %v1269 = vmul.f32 %v1236, %v595
        %v1270 = vld [vmem:[%s2] sm:$0x3]
        %v1272 = vlaneseq
        %v1273 = vshrl.u32 %v1272, 7
        %v1274 = vsub.s32 0, %v1273
        %v1275 = vrot.slane %v1270, %v1274
        %v1276 = vlaneseq
        %v1277 = vshrl.u32 %v1276, 7
        %v1278 = vsub.s32 1, %v1277
        %v1279 = vrot.slane %v1270, %v1278
        %v1282 = vadd.f32 %v1238, %v1275
        %v1283 = vadd.f32 %v1239, %v1279
        %v1284 = vadd.f32 %v1240, %v1275
        %v1285 = vadd.f32 %v1241, %v1279
        %v1286 = vadd.f32 %v1242, %v1275
        %v1287 = vadd.f32 %v1243, %v1279
        %v1288 = vadd.f32 %v1244, %v1275
        %v1289 = vadd.f32 %v1245, %v1279
        %v1290 = vadd.f32 %v1246, %v1275
        %v1291 = vadd.f32 %v1247, %v1279
        %v1292 = vadd.f32 %v1248, %v1275
        %v1293 = vadd.f32 %v1249, %v1279
        %v1294 = vadd.f32 %v1250, %v1275
        %v1295 = vadd.f32 %v1251, %v1279
        %v1296 = vadd.f32 %v1252, %v1275
        %v1297 = vadd.f32 %v1253, %v1279
        %v1298 = vadd.f32 %v1254, %v1275
        %v1299 = vadd.f32 %v1255, %v1279
        %v1300 = vadd.f32 %v1256, %v1275
        %v1301 = vadd.f32 %v1257, %v1279
        %v1302 = vadd.f32 %v1258, %v1275
        %v1303 = vadd.f32 %v1259, %v1279
        %v1304 = vadd.f32 %v1260, %v1275
        %v1305 = vadd.f32 %v1261, %v1279
        %v1306 = vadd.f32 %v1262, %v1275
        %v1307 = vadd.f32 %v1263, %v1279
        %v1308 = vadd.f32 %v1264, %v1275
        %v1309 = vadd.f32 %v1265, %v1279
        %v1310 = vadd.f32 %v1266, %v1275
        %v1311 = vadd.f32 %v1267, %v1279
        %v1312 = vadd.f32 %v1268, %v1275
        %v1313 = vadd.f32 %v1269, %v1279
        %v1314 = vmax.f32 %v1282, 0.0
        %v1315 = vmax.f32 %v1283, 0.0
        %v1316 = vmax.f32 %v1284, 0.0
        %v1317 = vmax.f32 %v1285, 0.0
        %v1318 = vmax.f32 %v1286, 0.0
        %v1319 = vmax.f32 %v1287, 0.0
        %v1320 = vmax.f32 %v1288, 0.0
        %v1321 = vmax.f32 %v1289, 0.0
        %v1322 = vmax.f32 %v1290, 0.0
        %v1323 = vmax.f32 %v1291, 0.0
        %v1324 = vmax.f32 %v1292, 0.0
        %v1325 = vmax.f32 %v1293, 0.0
        %v1326 = vmax.f32 %v1294, 0.0
        %v1327 = vmax.f32 %v1295, 0.0
        %v1328 = vmax.f32 %v1296, 0.0
        %v1329 = vmax.f32 %v1297, 0.0
        %v1330 = vmax.f32 %v1298, 0.0
        %v1331 = vmax.f32 %v1299, 0.0
        %v1332 = vmax.f32 %v1300, 0.0
        %v1333 = vmax.f32 %v1301, 0.0
        %v1334 = vmax.f32 %v1302, 0.0
        %v1335 = vmax.f32 %v1303, 0.0
        %v1336 = vmax.f32 %v1304, 0.0
        %v1337 = vmax.f32 %v1305, 0.0
        %v1338 = vmax.f32 %v1306, 0.0
        %v1339 = vmax.f32 %v1307, 0.0
        %v1340 = vmax.f32 %v1308, 0.0
        %v1341 = vmax.f32 %v1309, 0.0
        %v1342 = vmax.f32 %v1310, 0.0
        %v1343 = vmax.f32 %v1311, 0.0
        %v1344 = vmax.f32 %v1312, 0.0
        %v1345 = vmax.f32 %v1313, 0.0
        %v1346 = vpack.c.bf16 %v1316, %v1314
        %v1347 = vpack.c.bf16 %v1317, %v1315
        %v1348 = vpack.c.bf16 %v1320, %v1318
        %v1349 = vpack.c.bf16 %v1321, %v1319
        %v1350 = vpack.c.bf16 %v1324, %v1322
        %v1351 = vpack.c.bf16 %v1325, %v1323
        %v1352 = vpack.c.bf16 %v1328, %v1326
        %v1353 = vpack.c.bf16 %v1329, %v1327
        %v1354 = vpack.c.bf16 %v1332, %v1330
        %v1355 = vpack.c.bf16 %v1333, %v1331
        %v1356 = vpack.c.bf16 %v1336, %v1334
        %v1357 = vpack.c.bf16 %v1337, %v1335
        %v1358 = vpack.c.bf16 %v1340, %v1338
        %v1359 = vpack.c.bf16 %v1341, %v1339
        %v1360 = vpack.c.bf16 %v1344, %v1342
        %v1361 = vpack.c.bf16 %v1345, %v1343
        %v1362 = vld [vmem:[#allocation7] sm:$0xff]
        %v1363 = vld [vmem:[#allocation7 + $0x8] sm:$0xff]
        %v1364 = vld [vmem:[#allocation7 + $0x10] sm:$0xff]
        %v1365 = vld [vmem:[#allocation7 + $0x18] sm:$0xff]
        %v1366 = vld [vmem:[#allocation7 + $0x20] sm:$0xff]
        %v1367 = vld [vmem:[#allocation7 + $0x28] sm:$0xff]
        %v1368 = vld [vmem:[#allocation7 + $0x30] sm:$0xff]
        %v1369 = vld [vmem:[#allocation7 + $0x38] sm:$0xff]
        %v1370 = vld [vmem:[#allocation7 + $0x40] sm:$0xff]
        %v1371 = vld [vmem:[#allocation7 + $0x48] sm:$0xff]
        %v1372 = vld [vmem:[#allocation7 + $0x50] sm:$0xff]
        %v1373 = vld [vmem:[#allocation7 + $0x58] sm:$0xff]
        %v1374 = vld [vmem:[#allocation7 + $0x60] sm:$0xff]
        %v1375 = vld [vmem:[#allocation7 + $0x68] sm:$0xff]
        %v1376 = vld [vmem:[#allocation7 + $0x70] sm:$0xff]
        %v1377 = vld [vmem:[#allocation7 + $0x78] sm:$0xff]
        %v1378 = vld [vmem:[#allocation7 + $0x80] sm:$0xff]
        %v1379 = vld [vmem:[#allocation7 + $0x88] sm:$0xff]
        %v1380 = vld [vmem:[#allocation7 + $0x90] sm:$0xff]
        %v1381 = vld [vmem:[#allocation7 + $0x98] sm:$0xff]
        %v1382 = vld [vmem:[#allocation7 + $0xa0] sm:$0xff]
        %v1383 = vld [vmem:[#allocation7 + $0xa8] sm:$0xff]
        %v1384 = vld [vmem:[#allocation7 + $0xb0] sm:$0xff]
        %v1385 = vld [vmem:[#allocation7 + $0xb8] sm:$0xff]
        %v1386 = vld [vmem:[#allocation7 + $0xc0] sm:$0xff]
        %v1387 = vld [vmem:[#allocation7 + $0xc8] sm:$0xff]
        %v1388 = vld [vmem:[#allocation7 + $0xd0] sm:$0xff]
        %v1389 = vld [vmem:[#allocation7 + $0xd8] sm:$0xff]
        %v1390 = vld [vmem:[#allocation7 + $0xe0] sm:$0xff]
        %v1391 = vld [vmem:[#allocation7 + $0xe8] sm:$0xff]
        %v1392 = vld [vmem:[#allocation7 + $0xf0] sm:$0xff]
        %v1393 = vld [vmem:[#allocation7 + $0xf8] sm:$0xff]
        %v1394 = vld [vmem:[#allocation8] sm:$0x3]
        %v1396 = vlaneseq
        %v1397 = vshrl.u32 %v1396, 7
        %v1398 = vsub.s32 0, %v1397
        %v1399 = vrot.slane %v1394, %v1398
        %v1400 = vlaneseq
        %v1401 = vshrl.u32 %v1400, 7
        %v1402 = vsub.s32 1, %v1401
        %v1403 = vrot.slane %v1394, %v1402
        %v1438 = vunpack.c.l.b16 %v1362
        %v1439 = vunpack.c.h.b16 %v1362
        %v1440 = vunpack.c.l.b16 %v1363
        %v1441 = vunpack.c.h.b16 %v1363
        %v1442 = vunpack.c.l.b16 %v1364
        %v1443 = vunpack.c.h.b16 %v1364
        %v1444 = vunpack.c.l.b16 %v1365
        %v1445 = vunpack.c.h.b16 %v1365
        %v1446 = vunpack.c.l.b16 %v1366
        %v1447 = vunpack.c.h.b16 %v1366
        %v1448 = vunpack.c.l.b16 %v1367
        %v1449 = vunpack.c.h.b16 %v1367
        %v1450 = vunpack.c.l.b16 %v1368
        %v1451 = vunpack.c.h.b16 %v1368
        %v1452 = vunpack.c.l.b16 %v1369
        %v1453 = vunpack.c.h.b16 %v1369
        %v1454 = vunpack.c.l.b16 %v1370
        %v1455 = vunpack.c.h.b16 %v1370
        %v1456 = vunpack.c.l.b16 %v1371
        %v1457 = vunpack.c.h.b16 %v1371
        %v1458 = vunpack.c.l.b16 %v1372
        %v1459 = vunpack.c.h.b16 %v1372
        %v1460 = vunpack.c.l.b16 %v1373
        %v1461 = vunpack.c.h.b16 %v1373
        %v1462 = vunpack.c.l.b16 %v1374
        %v1463 = vunpack.c.h.b16 %v1374
        %v1464 = vunpack.c.l.b16 %v1375
        %v1465 = vunpack.c.h.b16 %v1375
        %v1466 = vunpack.c.l.b16 %v1376
        %v1467 = vunpack.c.h.b16 %v1376
        %v1468 = vunpack.c.l.b16 %v1377
        %v1469 = vunpack.c.h.b16 %v1377
        %v1470 = vunpack.c.l.b16 %v1378
        %v1471 = vunpack.c.h.b16 %v1378
        %v1472 = vunpack.c.l.b16 %v1379
        %v1473 = vunpack.c.h.b16 %v1379
        %v1474 = vunpack.c.l.b16 %v1380
        %v1475 = vunpack.c.h.b16 %v1380
        %v1476 = vunpack.c.l.b16 %v1381
        %v1477 = vunpack.c.h.b16 %v1381
        %v1478 = vunpack.c.l.b16 %v1382
        %v1479 = vunpack.c.h.b16 %v1382
        %v1480 = vunpack.c.l.b16 %v1383
        %v1481 = vunpack.c.h.b16 %v1383
        %v1482 = vunpack.c.l.b16 %v1384
        %v1483 = vunpack.c.h.b16 %v1384
        %v1484 = vunpack.c.l.b16 %v1385
        %v1485 = vunpack.c.h.b16 %v1385
        %v1486 = vunpack.c.l.b16 %v1386
        %v1487 = vunpack.c.h.b16 %v1386
        %v1488 = vunpack.c.l.b16 %v1387
        %v1489 = vunpack.c.h.b16 %v1387
        %v1490 = vunpack.c.l.b16 %v1388
        %v1491 = vunpack.c.h.b16 %v1388
        %v1492 = vunpack.c.l.b16 %v1389
        %v1493 = vunpack.c.h.b16 %v1389
        %v1494 = vunpack.c.l.b16 %v1390
        %v1495 = vunpack.c.h.b16 %v1390
        %v1496 = vunpack.c.l.b16 %v1391
        %v1497 = vunpack.c.h.b16 %v1391
        %v1498 = vunpack.c.l.b16 %v1392
        %v1499 = vunpack.c.h.b16 %v1392
        %v1500 = vunpack.c.l.b16 %v1393
        %v1501 = vunpack.c.h.b16 %v1393
        %v1502 = vpack.c.b16 %v1440, %v1438
        %v1503 = vpack.c.b16 %v1441, %v1439
        %v1504 = vpack.c.b16 %v1444, %v1442
        %v1505 = vpack.c.b16 %v1445, %v1443
        %v1506 = vpack.c.b16 %v1448, %v1446
        %v1507 = vpack.c.b16 %v1449, %v1447
        %v1508 = vpack.c.b16 %v1452, %v1450
        %v1509 = vpack.c.b16 %v1453, %v1451
        %v1510 = vpack.c.b16 %v1456, %v1454
        %v1511 = vpack.c.b16 %v1457, %v1455
        %v1512 = vpack.c.b16 %v1460, %v1458
        %v1513 = vpack.c.b16 %v1461, %v1459
        %v1514 = vpack.c.b16 %v1464, %v1462
        %v1515 = vpack.c.b16 %v1465, %v1463
        %v1516 = vpack.c.b16 %v1468, %v1466
        %v1517 = vpack.c.b16 %v1469, %v1467
        %v1518 = vpack.c.b16 %v1472, %v1470
        %v1519 = vpack.c.b16 %v1473, %v1471
        %v1520 = vpack.c.b16 %v1476, %v1474
        %v1521 = vpack.c.b16 %v1477, %v1475
        %v1522 = vpack.c.b16 %v1480, %v1478
        %v1523 = vpack.c.b16 %v1481, %v1479
        %v1524 = vpack.c.b16 %v1484, %v1482
        %v1525 = vpack.c.b16 %v1485, %v1483
        %v1526 = vpack.c.b16 %v1488, %v1486
        %v1527 = vpack.c.b16 %v1489, %v1487
        %v1528 = vpack.c.b16 %v1492, %v1490
        %v1529 = vpack.c.b16 %v1493, %v1491
        %v1530 = vpack.c.b16 %v1496, %v1494
        %v1531 = vpack.c.b16 %v1497, %v1495
        %v1532 = vpack.c.b16 %v1500, %v1498
        %v1533 = vpack.c.b16 %v1501, %v1499
        %1566 = vmatprep.subr.bf16.mxu0 %v1517
        %1567 = vmatpush1.bf16.msra.mxu0 %v1516
        %1568 = vmatprep.subr.bf16.mxu0 %v1515
        %1569 = vmatpush1.bf16.msra.mxu0 %v1514
        %1570 = vmatprep.subr.bf16.mxu0 %v1513
        %1571 = vmatpush1.bf16.msra.mxu0 %v1512
        %1572 = vmatprep.subr.bf16.mxu0 %v1511
        %1573 = vmatpush1.bf16.msra.mxu0 %v1510
        %1574 = vmatprep.subr.bf16.mxu0 %v1509
        %1575 = vmatpush1.bf16.msra.mxu0 %v1508
        %1576 = vmatprep.subr.bf16.mxu0 %v1507
        %1577 = vmatpush1.bf16.msra.mxu0 %v1506
        %1578 = vmatprep.subr.bf16.mxu0 %v1505
        %1579 = vmatpush1.bf16.msra.mxu0 %v1504
        %1580 = vmatprep.subr.bf16.mxu0 %v1503
        %1581 = vmatpush1.bf16.msra.mxu0 %v1502
        %1582 = vmatprep.subr.bf16.mxu0 %v1533
        %1583 = vmatpush2.bf16.msra.mxu0 %v1532
        %1584 = vmatprep.subr.bf16.mxu0 %v1531
        %1585 = vmatpush2.bf16.msra.mxu0 %v1530
        %1586 = vmatprep.subr.bf16.mxu0 %v1529
        %1587 = vmatpush2.bf16.msra.mxu0 %v1528
        %1588 = vmatprep.subr.bf16.mxu0 %v1527
        %1589 = vmatpush2.bf16.msra.mxu0 %v1526
        %1590 = vmatprep.subr.bf16.mxu0 %v1525
        %1591 = vmatpush2.bf16.msra.mxu0 %v1524
        %1592 = vmatprep.subr.bf16.mxu0 %v1523
        %1593 = vmatpush2.bf16.msra.mxu0 %v1522
        %1594 = vmatprep.subr.bf16.mxu0 %v1521
        %1595 = vmatpush2.bf16.msra.mxu0 %v1520
        %1596 = vmatprep.subr.bf16.mxu0 %v1519
        %1597 = vmatpush2.bf16.msra.mxu0 %v1518
        %1598 = vmatprep.mubr.bf16.mxu0 %v1347
        %1599 = vmatmul.mubr.bf16.gmra.mxu0 %v1346
        %v1600 = vpop.f32.mrf.mxu0
        %v1601 = vadd.f32 %v1399, %v1600
        %v1602 = vpop.f32.mrf.mxu0
        %v1603 = vadd.f32 %v1403, %v1602
        %v1604 = vpop.f32.mrf.mxu0
        %v1605 = vadd.f32 %v1399, %v1604
        %v1606 = vpop.f32.mrf.mxu0
        %v1607 = vadd.f32 %v1403, %v1606
        %1608 = vmatprep.mubr.bf16.mxu0 %v1349
        %1609 = vmatmul.mubr.bf16.gmra.mxu0 %v1348
        %v1610 = vpop.f32.mrf.mxu0
        %v1611 = vadd.f32 %v1399, %v1610
        %v1612 = vpop.f32.mrf.mxu0
        %v1613 = vadd.f32 %v1403, %v1612
        %v1614 = vpop.f32.mrf.mxu0
        %v1615 = vadd.f32 %v1399, %v1614
        %v1616 = vpop.f32.mrf.mxu0
        %v1617 = vadd.f32 %v1403, %v1616
        %1618 = vmatprep.mubr.bf16.mxu0 %v1351
        %1619 = vmatmul.mubr.bf16.gmra.mxu0 %v1350
        %v1620 = vpop.f32.mrf.mxu0
        %v1621 = vadd.f32 %v1399, %v1620
        %v1622 = vpop.f32.mrf.mxu0
        %v1623 = vadd.f32 %v1403, %v1622
        %v1624 = vpop.f32.mrf.mxu0
        %v1625 = vadd.f32 %v1399, %v1624
        %v1626 = vpop.f32.mrf.mxu0
        %v1627 = vadd.f32 %v1403, %v1626
        %1628 = vmatprep.mubr.bf16.mxu0 %v1353
        %1629 = vmatmul.mubr.bf16.gmra.mxu0 %v1352
        %v1630 = vpop.f32.mrf.mxu0
        %v1631 = vadd.f32 %v1399, %v1630
        %v1632 = vpop.f32.mrf.mxu0
        %v1633 = vadd.f32 %v1403, %v1632
        %v1634 = vpop.f32.mrf.mxu0
        %v1635 = vadd.f32 %v1399, %v1634
        %v1636 = vpop.f32.mrf.mxu0
        %v1637 = vadd.f32 %v1403, %v1636
        %1638 = vmatprep.mubr.bf16.mxu0 %v1355
        %1639 = vmatmul.mubr.bf16.gmra.mxu0 %v1354
        %v1640 = vpop.f32.mrf.mxu0
        %v1641 = vadd.f32 %v1399, %v1640
        %v1642 = vpop.f32.mrf.mxu0
        %v1643 = vadd.f32 %v1403, %v1642
        %v1644 = vpop.f32.mrf.mxu0
        %v1645 = vadd.f32 %v1399, %v1644
        %v1646 = vpop.f32.mrf.mxu0
        %v1647 = vadd.f32 %v1403, %v1646
        %1648 = vmatprep.mubr.bf16.mxu0 %v1357
        %1649 = vmatmul.mubr.bf16.gmra.mxu0 %v1356
        %v1650 = vpop.f32.mrf.mxu0
        %v1651 = vadd.f32 %v1399, %v1650
        %v1652 = vpop.f32.mrf.mxu0
        %v1653 = vadd.f32 %v1403, %v1652
        %v1654 = vpop.f32.mrf.mxu0
        %v1655 = vadd.f32 %v1399, %v1654
        %v1656 = vpop.f32.mrf.mxu0
        %v1657 = vadd.f32 %v1403, %v1656
        %1658 = vmatprep.mubr.bf16.mxu0 %v1359
        %1659 = vmatmul.mubr.bf16.gmra.mxu0 %v1358
        %v1660 = vpop.f32.mrf.mxu0
        %v1661 = vadd.f32 %v1399, %v1660
        %v1662 = vpop.f32.mrf.mxu0
        %v1663 = vadd.f32 %v1403, %v1662
        %v1664 = vpop.f32.mrf.mxu0
        %v1665 = vadd.f32 %v1399, %v1664
        %v1666 = vpop.f32.mrf.mxu0
        %v1667 = vadd.f32 %v1403, %v1666
        %1668 = vmatprep.mubr.bf16.mxu0 %v1361
        %1669 = vmatmul.mubr.bf16.gmra.mxu0 %v1360
        %v1670 = vpop.f32.mrf.mxu0
        %v1671 = vadd.f32 %v1399, %v1670
        %v1672 = vpop.f32.mrf.mxu0
        %v1673 = vadd.f32 %v1403, %v1672
        %v1674 = vpop.f32.mrf.mxu0
        %v1675 = vadd.f32 %v1399, %v1674
        %v1676 = vpop.f32.mrf.mxu0
        %v1677 = vadd.f32 %v1403, %v1676
        %1678 = vdwg.mxu0
        %v1679 = vmax.f32 %v1601, 0.0
        %v1680 = vmax.f32 %v1603, 0.0
        %v1681 = vmax.f32 %v1605, 0.0
        %v1682 = vmax.f32 %v1607, 0.0
        %v1683 = vmax.f32 %v1611, 0.0
        %v1684 = vmax.f32 %v1613, 0.0
        %v1685 = vmax.f32 %v1615, 0.0
        %v1686 = vmax.f32 %v1617, 0.0
        %v1687 = vmax.f32 %v1621, 0.0
        %v1688 = vmax.f32 %v1623, 0.0
        %v1689 = vmax.f32 %v1625, 0.0
        %v1690 = vmax.f32 %v1627, 0.0
        %v1691 = vmax.f32 %v1631, 0.0
        %v1692 = vmax.f32 %v1633, 0.0
        %v1693 = vmax.f32 %v1635, 0.0
        %v1694 = vmax.f32 %v1637, 0.0
        %v1695 = vmax.f32 %v1641, 0.0
        %v1696 = vmax.f32 %v1643, 0.0
        %v1697 = vmax.f32 %v1645, 0.0
        %v1698 = vmax.f32 %v1647, 0.0
        %v1699 = vmax.f32 %v1651, 0.0
        %v1700 = vmax.f32 %v1653, 0.0
        %v1701 = vmax.f32 %v1655, 0.0
        %v1702 = vmax.f32 %v1657, 0.0
        %v1703 = vmax.f32 %v1661, 0.0
        %v1704 = vmax.f32 %v1663, 0.0
        %v1705 = vmax.f32 %v1665, 0.0
        %v1706 = vmax.f32 %v1667, 0.0
        %v1707 = vmax.f32 %v1671, 0.0
        %v1708 = vmax.f32 %v1673, 0.0
        %v1709 = vmax.f32 %v1675, 0.0
        %v1710 = vmax.f32 %v1677, 0.0
        %v1711 = vpack.c.bf16 %v1681, %v1679
        %v1712 = vpack.c.bf16 %v1682, %v1680
        %v1713 = vpack.c.bf16 %v1685, %v1683
        %v1714 = vpack.c.bf16 %v1686, %v1684
        %v1715 = vpack.c.bf16 %v1689, %v1687
        %v1716 = vpack.c.bf16 %v1690, %v1688
        %v1717 = vpack.c.bf16 %v1693, %v1691
        %v1718 = vpack.c.bf16 %v1694, %v1692
        %v1719 = vpack.c.bf16 %v1697, %v1695
        %v1720 = vpack.c.bf16 %v1698, %v1696
        %v1721 = vpack.c.bf16 %v1701, %v1699
        %v1722 = vpack.c.bf16 %v1702, %v1700
        %v1723 = vpack.c.bf16 %v1705, %v1703
        %v1724 = vpack.c.bf16 %v1706, %v1704
        %v1725 = vpack.c.bf16 %v1709, %v1707
        %v1726 = vpack.c.bf16 %v1710, %v1708
        %v1727 = vld [vmem:[#allocation10] sm:$0xff]
        %v1728 = vld [vmem:[#allocation10 + $0x8] sm:$0xff]
        %v1729 = vld [vmem:[#allocation10 + $0x10] sm:$0xff]
        %v1730 = vld [vmem:[#allocation10 + $0x18] sm:$0xff]
        %v1731 = vld [vmem:[#allocation10 + $0x20] sm:$0xff]
        %v1732 = vld [vmem:[#allocation10 + $0x28] sm:$0xff]
        %v1733 = vld [vmem:[#allocation10 + $0x30] sm:$0xff]
        %v1734 = vld [vmem:[#allocation10 + $0x38] sm:$0xff]
        %v1735 = vld [vmem:[#allocation10 + $0x40] sm:$0xff]
        %v1736 = vld [vmem:[#allocation10 + $0x48] sm:$0xff]
        %v1737 = vld [vmem:[#allocation10 + $0x50] sm:$0xff]
        %v1738 = vld [vmem:[#allocation10 + $0x58] sm:$0xff]
        %v1739 = vld [vmem:[#allocation10 + $0x60] sm:$0xff]
        %v1740 = vld [vmem:[#allocation10 + $0x68] sm:$0xff]
        %v1741 = vld [vmem:[#allocation10 + $0x70] sm:$0xff]
        %v1742 = vld [vmem:[#allocation10 + $0x78] sm:$0xff]
        %v1743 = vld [vmem:[#allocation10 + $0x80] sm:$0xff]
        %v1744 = vld [vmem:[#allocation10 + $0x88] sm:$0xff]
        %v1745 = vld [vmem:[#allocation10 + $0x90] sm:$0xff]
        %v1746 = vld [vmem:[#allocation10 + $0x98] sm:$0xff]
        %v1747 = vld [vmem:[#allocation10 + $0xa0] sm:$0xff]
        %v1748 = vld [vmem:[#allocation10 + $0xa8] sm:$0xff]
        %v1749 = vld [vmem:[#allocation10 + $0xb0] sm:$0xff]
        %v1750 = vld [vmem:[#allocation10 + $0xb8] sm:$0xff]
        %v1751 = vld [vmem:[#allocation10 + $0xc0] sm:$0xff]
        %v1752 = vld [vmem:[#allocation10 + $0xc8] sm:$0xff]
        %v1753 = vld [vmem:[#allocation10 + $0xd0] sm:$0xff]
        %v1754 = vld [vmem:[#allocation10 + $0xd8] sm:$0xff]
        %v1755 = vld [vmem:[#allocation10 + $0xe0] sm:$0xff]
        %v1756 = vld [vmem:[#allocation10 + $0xe8] sm:$0xff]
        %v1757 = vld [vmem:[#allocation10 + $0xf0] sm:$0xff]
        %v1758 = vld [vmem:[#allocation10 + $0xf8] sm:$0xff]
        %v1759 = vld [vmem:[#allocation10 + $0x100] sm:$0xff]
        %v1760 = vld [vmem:[#allocation10 + $0x108] sm:$0xff]
        %v1761 = vld [vmem:[#allocation10 + $0x110] sm:$0xff]
        %v1762 = vld [vmem:[#allocation10 + $0x118] sm:$0xff]
        %v1763 = vld [vmem:[#allocation10 + $0x120] sm:$0xff]
        %v1764 = vld [vmem:[#allocation10 + $0x128] sm:$0xff]
        %v1765 = vld [vmem:[#allocation10 + $0x130] sm:$0xff]
        %v1766 = vld [vmem:[#allocation10 + $0x138] sm:$0xff]
        %v1767 = vld [vmem:[#allocation10 + $0x140] sm:$0xff]
        %v1768 = vld [vmem:[#allocation10 + $0x148] sm:$0xff]
        %v1769 = vld [vmem:[#allocation10 + $0x150] sm:$0xff]
        %v1770 = vld [vmem:[#allocation10 + $0x158] sm:$0xff]
        %v1771 = vld [vmem:[#allocation10 + $0x160] sm:$0xff]
        %v1772 = vld [vmem:[#allocation10 + $0x168] sm:$0xff]
        %v1773 = vld [vmem:[#allocation10 + $0x170] sm:$0xff]
        %v1774 = vld [vmem:[#allocation10 + $0x178] sm:$0xff]
        %v1775 = vld [vmem:[#allocation10 + $0x180] sm:$0xff]
        %v1776 = vld [vmem:[#allocation10 + $0x188] sm:$0xff]
        %v1777 = vld [vmem:[#allocation10 + $0x190] sm:$0xff]
        %v1778 = vld [vmem:[#allocation10 + $0x198] sm:$0xff]
        %v1779 = vld [vmem:[#allocation10 + $0x1a0] sm:$0xff]
        %v1780 = vld [vmem:[#allocation10 + $0x1a8] sm:$0xff]
        %v1781 = vld [vmem:[#allocation10 + $0x1b0] sm:$0xff]
        %v1782 = vld [vmem:[#allocation10 + $0x1b8] sm:$0xff]
        %v1783 = vld [vmem:[#allocation10 + $0x1c0] sm:$0xff]
        %v1784 = vld [vmem:[#allocation10 + $0x1c8] sm:$0xff]
        %v1785 = vld [vmem:[#allocation10 + $0x1d0] sm:$0xff]
        %v1786 = vld [vmem:[#allocation10 + $0x1d8] sm:$0xff]
        %v1787 = vld [vmem:[#allocation10 + $0x1e0] sm:$0xff]
        %v1788 = vld [vmem:[#allocation10 + $0x1e8] sm:$0xff]
        %v1789 = vld [vmem:[#allocation10 + $0x1f0] sm:$0xff]
        %v1790 = vld [vmem:[#allocation10 + $0x1f8] sm:$0xff]
        %v1791 = vld [vmem:[%s6] sm:$0xf]
        %v1793 = vlaneseq
        %v1794 = vshrl.u32 %v1793, 7
        %v1795 = vsub.s32 0, %v1794
        %v1796 = vrot.slane %v1791, %v1795
        %v1797 = vlaneseq
        %v1798 = vshrl.u32 %v1797, 7
        %v1799 = vsub.s32 1, %v1798
        %v1800 = vrot.slane %v1791, %v1799
        %v1801 = vlaneseq
        %v1802 = vshrl.u32 %v1801, 7
        %v1803 = vsub.s32 2, %v1802
        %v1804 = vrot.slane %v1791, %v1803
        %v1805 = vlaneseq
        %v1806 = vshrl.u32 %v1805, 7
        %v1807 = vsub.s32 3, %v1806
        %v1808 = vrot.slane %v1791, %v1807
        %v1877 = vunpack.c.l.b16 %v1727
        %v1878 = vunpack.c.h.b16 %v1727
        %v1879 = vunpack.c.l.b16 %v1728
        %v1880 = vunpack.c.h.b16 %v1728
        %v1881 = vunpack.c.l.b16 %v1729
        %v1882 = vunpack.c.h.b16 %v1729
        %v1883 = vunpack.c.l.b16 %v1730
        %v1884 = vunpack.c.h.b16 %v1730
        %v1885 = vunpack.c.l.b16 %v1731
        %v1886 = vunpack.c.h.b16 %v1731
        %v1887 = vunpack.c.l.b16 %v1732
        %v1888 = vunpack.c.h.b16 %v1732
        %v1889 = vunpack.c.l.b16 %v1733
        %v1890 = vunpack.c.h.b16 %v1733
        %v1891 = vunpack.c.l.b16 %v1734
        %v1892 = vunpack.c.h.b16 %v1734
        %v1893 = vunpack.c.l.b16 %v1735
        %v1894 = vunpack.c.h.b16 %v1735
        %v1895 = vunpack.c.l.b16 %v1736
        %v1896 = vunpack.c.h.b16 %v1736
        %v1897 = vunpack.c.l.b16 %v1737
        %v1898 = vunpack.c.h.b16 %v1737
        %v1899 = vunpack.c.l.b16 %v1738
        %v1900 = vunpack.c.h.b16 %v1738
        %v1901 = vunpack.c.l.b16 %v1739
        %v1902 = vunpack.c.h.b16 %v1739
        %v1903 = vunpack.c.l.b16 %v1740
        %v1904 = vunpack.c.h.b16 %v1740
        %v1905 = vunpack.c.l.b16 %v1741
        %v1906 = vunpack.c.h.b16 %v1741
        %v1907 = vunpack.c.l.b16 %v1742
        %v1908 = vunpack.c.h.b16 %v1742
        %v1909 = vunpack.c.l.b16 %v1743
        %v1910 = vunpack.c.h.b16 %v1743
        %v1911 = vunpack.c.l.b16 %v1744
        %v1912 = vunpack.c.h.b16 %v1744
        %v1913 = vunpack.c.l.b16 %v1745
        %v1914 = vunpack.c.h.b16 %v1745
        %v1915 = vunpack.c.l.b16 %v1746
        %v1916 = vunpack.c.h.b16 %v1746
        %v1917 = vunpack.c.l.b16 %v1747
        %v1918 = vunpack.c.h.b16 %v1747
        %v1919 = vunpack.c.l.b16 %v1748
        %v1920 = vunpack.c.h.b16 %v1748
        %v1921 = vunpack.c.l.b16 %v1749
        %v1922 = vunpack.c.h.b16 %v1749
        %v1923 = vunpack.c.l.b16 %v1750
        %v1924 = vunpack.c.h.b16 %v1750
        %v1925 = vunpack.c.l.b16 %v1751
        %v1926 = vunpack.c.h.b16 %v1751
        %v1927 = vunpack.c.l.b16 %v1752
        %v1928 = vunpack.c.h.b16 %v1752
        %v1929 = vunpack.c.l.b16 %v1753
        %v1930 = vunpack.c.h.b16 %v1753
        %v1931 = vunpack.c.l.b16 %v1754
        %v1932 = vunpack.c.h.b16 %v1754
        %v1933 = vunpack.c.l.b16 %v1755
        %v1934 = vunpack.c.h.b16 %v1755
        %v1935 = vunpack.c.l.b16 %v1756
        %v1936 = vunpack.c.h.b16 %v1756
        %v1937 = vunpack.c.l.b16 %v1757
        %v1938 = vunpack.c.h.b16 %v1757
        %v1939 = vunpack.c.l.b16 %v1758
        %v1940 = vunpack.c.h.b16 %v1758
        %v1941 = vunpack.c.l.b16 %v1759
        %v1942 = vunpack.c.h.b16 %v1759
        %v1943 = vunpack.c.l.b16 %v1760
        %v1944 = vunpack.c.h.b16 %v1760
        %v1945 = vunpack.c.l.b16 %v1761
        %v1946 = vunpack.c.h.b16 %v1761
        %v1947 = vunpack.c.l.b16 %v1762
        %v1948 = vunpack.c.h.b16 %v1762
        %v1949 = vunpack.c.l.b16 %v1763
        %v1950 = vunpack.c.h.b16 %v1763
        %v1951 = vunpack.c.l.b16 %v1764
        %v1952 = vunpack.c.h.b16 %v1764
        %v1953 = vunpack.c.l.b16 %v1765
        %v1954 = vunpack.c.h.b16 %v1765
        %v1955 = vunpack.c.l.b16 %v1766
        %v1956 = vunpack.c.h.b16 %v1766
        %v1957 = vunpack.c.l.b16 %v1767
        %v1958 = vunpack.c.h.b16 %v1767
        %v1959 = vunpack.c.l.b16 %v1768
        %v1960 = vunpack.c.h.b16 %v1768
        %v1961 = vunpack.c.l.b16 %v1769
        %v1962 = vunpack.c.h.b16 %v1769
        %v1963 = vunpack.c.l.b16 %v1770
        %v1964 = vunpack.c.h.b16 %v1770
        %v1965 = vunpack.c.l.b16 %v1771
        %v1966 = vunpack.c.h.b16 %v1771
        %v1967 = vunpack.c.l.b16 %v1772
        %v1968 = vunpack.c.h.b16 %v1772
        %v1969 = vunpack.c.l.b16 %v1773
        %v1970 = vunpack.c.h.b16 %v1773
        %v1971 = vunpack.c.l.b16 %v1774
        %v1972 = vunpack.c.h.b16 %v1774
        %v1973 = vunpack.c.l.b16 %v1775
        %v1974 = vunpack.c.h.b16 %v1775
        %v1975 = vunpack.c.l.b16 %v1776
        %v1976 = vunpack.c.h.b16 %v1776
        %v1977 = vunpack.c.l.b16 %v1777
        %v1978 = vunpack.c.h.b16 %v1777
        %v1979 = vunpack.c.l.b16 %v1778
        %v1980 = vunpack.c.h.b16 %v1778
        %v1981 = vunpack.c.l.b16 %v1779
        %v1982 = vunpack.c.h.b16 %v1779
        %v1983 = vunpack.c.l.b16 %v1780
        %v1984 = vunpack.c.h.b16 %v1780
        %v1985 = vunpack.c.l.b16 %v1781
        %v1986 = vunpack.c.h.b16 %v1781
        %v1987 = vunpack.c.l.b16 %v1782
        %v1988 = vunpack.c.h.b16 %v1782
        %v1989 = vunpack.c.l.b16 %v1783
        %v1990 = vunpack.c.h.b16 %v1783
        %v1991 = vunpack.c.l.b16 %v1784
        %v1992 = vunpack.c.h.b16 %v1784
        %v1993 = vunpack.c.l.b16 %v1785
        %v1994 = vunpack.c.h.b16 %v1785
        %v1995 = vunpack.c.l.b16 %v1786
        %v1996 = vunpack.c.h.b16 %v1786
        %v1997 = vunpack.c.l.b16 %v1787
        %v1998 = vunpack.c.h.b16 %v1787
        %v1999 = vunpack.c.l.b16 %v1788
        %v2000 = vunpack.c.h.b16 %v1788
        %v2001 = vunpack.c.l.b16 %v1789
        %v2002 = vunpack.c.h.b16 %v1789
        %v2003 = vunpack.c.l.b16 %v1790
        %v2004 = vunpack.c.h.b16 %v1790
        %v2005 = vpack.c.b16 %v1881, %v1877
        %v2006 = vpack.c.b16 %v1882, %v1878
        %v2007 = vpack.c.b16 %v1883, %v1879
        %v2008 = vpack.c.b16 %v1884, %v1880
        %v2009 = vpack.c.b16 %v1889, %v1885
        %v2010 = vpack.c.b16 %v1890, %v1886
        %v2011 = vpack.c.b16 %v1891, %v1887
        %v2012 = vpack.c.b16 %v1892, %v1888
        %v2013 = vpack.c.b16 %v1897, %v1893
        %v2014 = vpack.c.b16 %v1898, %v1894
        %v2015 = vpack.c.b16 %v1899, %v1895
        %v2016 = vpack.c.b16 %v1900, %v1896
        %v2017 = vpack.c.b16 %v1905, %v1901
        %v2018 = vpack.c.b16 %v1906, %v1902
        %v2019 = vpack.c.b16 %v1907, %v1903
        %v2020 = vpack.c.b16 %v1908, %v1904
        %v2021 = vpack.c.b16 %v1913, %v1909
        %v2022 = vpack.c.b16 %v1914, %v1910
        %v2023 = vpack.c.b16 %v1915, %v1911
        %v2024 = vpack.c.b16 %v1916, %v1912
        %v2025 = vpack.c.b16 %v1921, %v1917
        %v2026 = vpack.c.b16 %v1922, %v1918
        %v2027 = vpack.c.b16 %v1923, %v1919
        %v2028 = vpack.c.b16 %v1924, %v1920
        %v2029 = vpack.c.b16 %v1929, %v1925
        %v2030 = vpack.c.b16 %v1930, %v1926
        %v2031 = vpack.c.b16 %v1931, %v1927
        %v2032 = vpack.c.b16 %v1932, %v1928
        %v2033 = vpack.c.b16 %v1937, %v1933
        %v2034 = vpack.c.b16 %v1938, %v1934
        %v2035 = vpack.c.b16 %v1939, %v1935
        %v2036 = vpack.c.b16 %v1940, %v1936
        %v2037 = vpack.c.b16 %v1945, %v1941
        %v2038 = vpack.c.b16 %v1946, %v1942
        %v2039 = vpack.c.b16 %v1947, %v1943
        %v2040 = vpack.c.b16 %v1948, %v1944
        %v2041 = vpack.c.b16 %v1953, %v1949
        %v2042 = vpack.c.b16 %v1954, %v1950
        %v2043 = vpack.c.b16 %v1955, %v1951
        %v2044 = vpack.c.b16 %v1956, %v1952
        %v2045 = vpack.c.b16 %v1961, %v1957
        %v2046 = vpack.c.b16 %v1962, %v1958
        %v2047 = vpack.c.b16 %v1963, %v1959
        %v2048 = vpack.c.b16 %v1964, %v1960
        %v2049 = vpack.c.b16 %v1969, %v1965
        %v2050 = vpack.c.b16 %v1970, %v1966
        %v2051 = vpack.c.b16 %v1971, %v1967
        %v2052 = vpack.c.b16 %v1972, %v1968
        %v2053 = vpack.c.b16 %v1977, %v1973
        %v2054 = vpack.c.b16 %v1978, %v1974
        %v2055 = vpack.c.b16 %v1979, %v1975
        %v2056 = vpack.c.b16 %v1980, %v1976
        %v2057 = vpack.c.b16 %v1985, %v1981
        %v2058 = vpack.c.b16 %v1986, %v1982
        %v2059 = vpack.c.b16 %v1987, %v1983
        %v2060 = vpack.c.b16 %v1988, %v1984
        %v2061 = vpack.c.b16 %v1993, %v1989
        %v2062 = vpack.c.b16 %v1994, %v1990
        %v2063 = vpack.c.b16 %v1995, %v1991
        %v2064 = vpack.c.b16 %v1996, %v1992
        %v2065 = vpack.c.b16 %v2001, %v1997
        %v2066 = vpack.c.b16 %v2002, %v1998
        %v2067 = vpack.c.b16 %v2003, %v1999
        %v2068 = vpack.c.b16 %v2004, %v2000
        %2133 = vmatprep.subr.bf16.mxu0 %v2034
        %2134 = vmatpush1.bf16.msra.mxu0 %v2033
        %2135 = vmatprep.subr.bf16.mxu0 %v2030
        %2136 = vmatpush1.bf16.msra.mxu0 %v2029
        %2137 = vmatprep.subr.bf16.mxu0 %v2026
        %2138 = vmatpush1.bf16.msra.mxu0 %v2025
        %2139 = vmatprep.subr.bf16.mxu0 %v2022
        %2140 = vmatpush1.bf16.msra.mxu0 %v2021
        %2141 = vmatprep.subr.bf16.mxu0 %v2018
        %2142 = vmatpush1.bf16.msra.mxu0 %v2017
        %2143 = vmatprep.subr.bf16.mxu0 %v2014
        %2144 = vmatpush1.bf16.msra.mxu0 %v2013
        %2145 = vmatprep.subr.bf16.mxu0 %v2010
        %2146 = vmatpush1.bf16.msra.mxu0 %v2009
        %2147 = vmatprep.subr.bf16.mxu0 %v2006
        %2148 = vmatpush1.bf16.msra.mxu0 %v2005
        %2149 = vmatprep.subr.bf16.mxu0 %v2066
        %2150 = vmatpush2.bf16.msra.mxu0 %v2065
        %2151 = vmatprep.subr.bf16.mxu0 %v2062
        %2152 = vmatpush2.bf16.msra.mxu0 %v2061
        %2153 = vmatprep.subr.bf16.mxu0 %v2058
        %2154 = vmatpush2.bf16.msra.mxu0 %v2057
        %2155 = vmatprep.subr.bf16.mxu0 %v2054
        %2156 = vmatpush2.bf16.msra.mxu0 %v2053
        %2157 = vmatprep.subr.bf16.mxu0 %v2050
        %2158 = vmatpush2.bf16.msra.mxu0 %v2049
        %2159 = vmatprep.subr.bf16.mxu0 %v2046
        %2160 = vmatpush2.bf16.msra.mxu0 %v2045
        %2161 = vmatprep.subr.bf16.mxu0 %v2042
        %2162 = vmatpush2.bf16.msra.mxu0 %v2041
        %2163 = vmatprep.subr.bf16.mxu0 %v2038
        %2164 = vmatpush2.bf16.msra.mxu0 %v2037
        %2165 = vmatprep.mubr.bf16.mxu0 %v1712
        %2166 = vmatmul.mubr.bf16.gmra.mxu0 %v1711
        %v2167 = vpop.f32.mrf.mxu0
        %v2168 = vadd.f32 %v1796, %v2167
        %v2169 = vpop.f32.mrf.mxu0
        %v2170 = vadd.f32 %v1800, %v2169
        %v2171 = vpop.f32.mrf.mxu0
        %v2172 = vadd.f32 %v1796, %v2171
        %v2173 = vpop.f32.mrf.mxu0
        %v2174 = vadd.f32 %v1800, %v2173
        %2175 = vmatprep.mubr.bf16.mxu0 %v1714
        %2176 = vmatmul.mubr.bf16.gmra.mxu0 %v1713
        %v2177 = vpop.f32.mrf.mxu0
        %v2178 = vadd.f32 %v1796, %v2177
        %v2179 = vpop.f32.mrf.mxu0
        %v2180 = vadd.f32 %v1800, %v2179
        %v2181 = vpop.f32.mrf.mxu0
        %v2182 = vadd.f32 %v1796, %v2181
        %v2183 = vpop.f32.mrf.mxu0
        %v2184 = vadd.f32 %v1800, %v2183
        %2185 = vmatprep.mubr.bf16.mxu0 %v1716
        %2186 = vmatmul.mubr.bf16.gmra.mxu0 %v1715
        %v2187 = vpop.f32.mrf.mxu0
        %v2188 = vadd.f32 %v1796, %v2187
        %v2189 = vpop.f32.mrf.mxu0
        %v2190 = vadd.f32 %v1800, %v2189
        %v2191 = vpop.f32.mrf.mxu0
        %v2192 = vadd.f32 %v1796, %v2191
        %v2193 = vpop.f32.mrf.mxu0
        %v2194 = vadd.f32 %v1800, %v2193
        %2195 = vmatprep.mubr.bf16.mxu0 %v1718
        %2196 = vmatmul.mubr.bf16.gmra.mxu0 %v1717
        %v2197 = vpop.f32.mrf.mxu0
        %v2198 = vadd.f32 %v1796, %v2197
        %v2199 = vpop.f32.mrf.mxu0
        %v2200 = vadd.f32 %v1800, %v2199
        %v2201 = vpop.f32.mrf.mxu0
        %v2202 = vadd.f32 %v1796, %v2201
        %v2203 = vpop.f32.mrf.mxu0
        %v2204 = vadd.f32 %v1800, %v2203
        %2205 = vmatprep.mubr.bf16.mxu0 %v1720
        %2206 = vmatmul.mubr.bf16.gmra.mxu0 %v1719
        %v2207 = vpop.f32.mrf.mxu0
        %v2208 = vadd.f32 %v1796, %v2207
        %v2209 = vpop.f32.mrf.mxu0
        %v2210 = vadd.f32 %v1800, %v2209
        %v2211 = vpop.f32.mrf.mxu0
        %v2212 = vadd.f32 %v1796, %v2211
        %v2213 = vpop.f32.mrf.mxu0
        %v2214 = vadd.f32 %v1800, %v2213
        %2215 = vmatprep.mubr.bf16.mxu0 %v1722
        %2216 = vmatmul.mubr.bf16.gmra.mxu0 %v1721
        %v2217 = vpop.f32.mrf.mxu0
        %v2218 = vadd.f32 %v1796, %v2217
        %v2219 = vpop.f32.mrf.mxu0
        %v2220 = vadd.f32 %v1800, %v2219
        %v2221 = vpop.f32.mrf.mxu0
        %v2222 = vadd.f32 %v1796, %v2221
        %v2223 = vpop.f32.mrf.mxu0
        %v2224 = vadd.f32 %v1800, %v2223
        %2225 = vmatprep.mubr.bf16.mxu0 %v1724
        %2226 = vmatmul.mubr.bf16.gmra.mxu0 %v1723
        %v2227 = vpop.f32.mrf.mxu0
        %v2228 = vadd.f32 %v1796, %v2227
        %v2229 = vpop.f32.mrf.mxu0
        %v2230 = vadd.f32 %v1800, %v2229
        %v2231 = vpop.f32.mrf.mxu0
        %v2232 = vadd.f32 %v1796, %v2231
        %v2233 = vpop.f32.mrf.mxu0
        %v2234 = vadd.f32 %v1800, %v2233
        %2235 = vmatprep.mubr.bf16.mxu0 %v1726
        %2236 = vmatmul.mubr.bf16.gmra.mxu0 %v1725
        %v2237 = vpop.f32.mrf.mxu0
        %v2238 = vadd.f32 %v1796, %v2237
        %v2239 = vpop.f32.mrf.mxu0
        %v2240 = vadd.f32 %v1800, %v2239
        %v2241 = vpop.f32.mrf.mxu0
        %v2242 = vadd.f32 %v1796, %v2241
        %v2243 = vpop.f32.mrf.mxu0
        %v2244 = vadd.f32 %v1800, %v2243
        %2245 = vdwg.mxu0
        %2246 = vmatprep.subr.bf16.mxu0 %v2036
        %2247 = vmatpush1.bf16.msra.mxu0 %v2035
        %2248 = vmatprep.subr.bf16.mxu0 %v2032
        %2249 = vmatpush1.bf16.msra.mxu0 %v2031
        %2250 = vmatprep.subr.bf16.mxu0 %v2028
        %2251 = vmatpush1.bf16.msra.mxu0 %v2027
        %2252 = vmatprep.subr.bf16.mxu0 %v2024
        %2253 = vmatpush1.bf16.msra.mxu0 %v2023
        %2254 = vmatprep.subr.bf16.mxu0 %v2020
        %2255 = vmatpush1.bf16.msra.mxu0 %v2019
        %2256 = vmatprep.subr.bf16.mxu0 %v2016
        %2257 = vmatpush1.bf16.msra.mxu0 %v2015
        %2258 = vmatprep.subr.bf16.mxu0 %v2012
        %2259 = vmatpush1.bf16.msra.mxu0 %v2011
        %2260 = vmatprep.subr.bf16.mxu0 %v2008
        %2261 = vmatpush1.bf16.msra.mxu0 %v2007
        %2262 = vmatprep.subr.bf16.mxu0 %v2068
        %2263 = vmatpush2.bf16.msra.mxu0 %v2067
        %2264 = vmatprep.subr.bf16.mxu0 %v2064
        %2265 = vmatpush2.bf16.msra.mxu0 %v2063
        %2266 = vmatprep.subr.bf16.mxu0 %v2060
        %2267 = vmatpush2.bf16.msra.mxu0 %v2059
        %2268 = vmatprep.subr.bf16.mxu0 %v2056
        %2269 = vmatpush2.bf16.msra.mxu0 %v2055
        %2270 = vmatprep.subr.bf16.mxu0 %v2052
        %2271 = vmatpush2.bf16.msra.mxu0 %v2051
        %2272 = vmatprep.subr.bf16.mxu0 %v2048
        %2273 = vmatpush2.bf16.msra.mxu0 %v2047
        %2274 = vmatprep.subr.bf16.mxu0 %v2044
        %2275 = vmatpush2.bf16.msra.mxu0 %v2043
        %2276 = vmatprep.subr.bf16.mxu0 %v2040
        %2277 = vmatpush2.bf16.msra.mxu0 %v2039
        %2278 = vmatprep.mubr.bf16.mxu0 %v1712
        %2279 = vmatmul.mubr.bf16.gmra.mxu0 %v1711
        %v2280 = vpop.f32.mrf.mxu0
        %v2281 = vadd.f32 %v1804, %v2280
        %v2282 = vpop.f32.mrf.mxu0
        %v2283 = vadd.f32 %v1808, %v2282
        %v2284 = vpop.f32.mrf.mxu0
        %v2285 = vadd.f32 %v1804, %v2284
        %v2286 = vpop.f32.mrf.mxu0
        %v2287 = vadd.f32 %v1808, %v2286
        %2288 = vmatprep.mubr.bf16.mxu0 %v1714
        %2289 = vmatmul.mubr.bf16.gmra.mxu0 %v1713
        %v2290 = vpop.f32.mrf.mxu0
        %v2291 = vadd.f32 %v1804, %v2290
        %v2292 = vpop.f32.mrf.mxu0
        %v2293 = vadd.f32 %v1808, %v2292
        %v2294 = vpop.f32.mrf.mxu0
        %v2295 = vadd.f32 %v1804, %v2294
        %v2296 = vpop.f32.mrf.mxu0
        %v2297 = vadd.f32 %v1808, %v2296
        %2298 = vmatprep.mubr.bf16.mxu0 %v1716
        %2299 = vmatmul.mubr.bf16.gmra.mxu0 %v1715
        %v2300 = vpop.f32.mrf.mxu0
        %v2301 = vadd.f32 %v1804, %v2300
        %v2302 = vpop.f32.mrf.mxu0
        %v2303 = vadd.f32 %v1808, %v2302
        %v2304 = vpop.f32.mrf.mxu0
        %v2305 = vadd.f32 %v1804, %v2304
        %v2306 = vpop.f32.mrf.mxu0
        %v2307 = vadd.f32 %v1808, %v2306
        %2308 = vmatprep.mubr.bf16.mxu0 %v1718
        %2309 = vmatmul.mubr.bf16.gmra.mxu0 %v1717
        %v2310 = vpop.f32.mrf.mxu0
        %v2311 = vadd.f32 %v1804, %v2310
        %v2312 = vpop.f32.mrf.mxu0
        %v2313 = vadd.f32 %v1808, %v2312
        %v2314 = vpop.f32.mrf.mxu0
        %v2315 = vadd.f32 %v1804, %v2314
        %v2316 = vpop.f32.mrf.mxu0
        %v2317 = vadd.f32 %v1808, %v2316
        %2318 = vmatprep.mubr.bf16.mxu0 %v1720
        %2319 = vmatmul.mubr.bf16.gmra.mxu0 %v1719
        %v2320 = vpop.f32.mrf.mxu0
        %v2321 = vadd.f32 %v1804, %v2320
        %v2322 = vpop.f32.mrf.mxu0
        %v2323 = vadd.f32 %v1808, %v2322
        %v2324 = vpop.f32.mrf.mxu0
        %v2325 = vadd.f32 %v1804, %v2324
        %v2326 = vpop.f32.mrf.mxu0
        %v2327 = vadd.f32 %v1808, %v2326
        %2328 = vmatprep.mubr.bf16.mxu0 %v1722
        %2329 = vmatmul.mubr.bf16.gmra.mxu0 %v1721
        %v2330 = vpop.f32.mrf.mxu0
        %v2331 = vadd.f32 %v1804, %v2330
        %v2332 = vpop.f32.mrf.mxu0
        %v2333 = vadd.f32 %v1808, %v2332
        %v2334 = vpop.f32.mrf.mxu0
        %v2335 = vadd.f32 %v1804, %v2334
        %v2336 = vpop.f32.mrf.mxu0
        %v2337 = vadd.f32 %v1808, %v2336
        %2338 = vmatprep.mubr.bf16.mxu0 %v1724
        %2339 = vmatmul.mubr.bf16.gmra.mxu0 %v1723
        %v2340 = vpop.f32.mrf.mxu0
        %v2341 = vadd.f32 %v1804, %v2340
        %v2342 = vpop.f32.mrf.mxu0
        %v2343 = vadd.f32 %v1808, %v2342
        %v2344 = vpop.f32.mrf.mxu0
        %v2345 = vadd.f32 %v1804, %v2344
        %v2346 = vpop.f32.mrf.mxu0
        %v2347 = vadd.f32 %v1808, %v2346
        %2348 = vmatprep.mubr.bf16.mxu0 %v1726
        %2349 = vmatmul.mubr.bf16.gmra.mxu0 %v1725
        %v2350 = vpop.f32.mrf.mxu0
        %v2351 = vadd.f32 %v1804, %v2350
        %v2352 = vpop.f32.mrf.mxu0
        %v2353 = vadd.f32 %v1808, %v2352
        %v2354 = vpop.f32.mrf.mxu0
        %v2355 = vadd.f32 %v1804, %v2354
        %v2356 = vpop.f32.mrf.mxu0
        %v2357 = vadd.f32 %v1808, %v2356
        %2358 = vdwg.mxu0
        %v2359 = vmul.f32 %v2168, %v2168
        %v2360 = vmul.f32 %v2170, %v2170
        %v2361 = vmul.f32 %v2281, %v2281
        %v2362 = vmul.f32 %v2283, %v2283
        %v2363 = vmul.f32 %v2172, %v2172
        %v2364 = vmul.f32 %v2174, %v2174
        %v2365 = vmul.f32 %v2285, %v2285
        %v2366 = vmul.f32 %v2287, %v2287
        %v2367 = vmul.f32 %v2178, %v2178
        %v2368 = vmul.f32 %v2180, %v2180
        %v2369 = vmul.f32 %v2291, %v2291
        %v2370 = vmul.f32 %v2293, %v2293
        %v2371 = vmul.f32 %v2182, %v2182
        %v2372 = vmul.f32 %v2184, %v2184
        %v2373 = vmul.f32 %v2295, %v2295
        %v2374 = vmul.f32 %v2297, %v2297
        %v2375 = vmul.f32 %v2188, %v2188
        %v2376 = vmul.f32 %v2190, %v2190
        %v2377 = vmul.f32 %v2301, %v2301
        %v2378 = vmul.f32 %v2303, %v2303
        %v2379 = vmul.f32 %v2192, %v2192
        %v2380 = vmul.f32 %v2194, %v2194
        %v2381 = vmul.f32 %v2305, %v2305
        %v2382 = vmul.f32 %v2307, %v2307
        %v2383 = vmul.f32 %v2198, %v2198
        %v2384 = vmul.f32 %v2200, %v2200
        %v2385 = vmul.f32 %v2311, %v2311
        %v2386 = vmul.f32 %v2313, %v2313
        %v2387 = vmul.f32 %v2202, %v2202
        %v2388 = vmul.f32 %v2204, %v2204
        %v2389 = vmul.f32 %v2315, %v2315
        %v2390 = vmul.f32 %v2317, %v2317
        %v2391 = vmul.f32 %v2208, %v2208
        %v2392 = vmul.f32 %v2210, %v2210
        %v2393 = vmul.f32 %v2321, %v2321
        %v2394 = vmul.f32 %v2323, %v2323
        %v2395 = vmul.f32 %v2212, %v2212
        %v2396 = vmul.f32 %v2214, %v2214
        %v2397 = vmul.f32 %v2325, %v2325
        %v2398 = vmul.f32 %v2327, %v2327
        %v2399 = vmul.f32 %v2218, %v2218
        %v2400 = vmul.f32 %v2220, %v2220
        %v2401 = vmul.f32 %v2331, %v2331
        %v2402 = vmul.f32 %v2333, %v2333
        %v2403 = vmul.f32 %v2222, %v2222
        %v2404 = vmul.f32 %v2224, %v2224
        %v2405 = vmul.f32 %v2335, %v2335
        %v2406 = vmul.f32 %v2337, %v2337
        %v2407 = vmul.f32 %v2228, %v2228
        %v2408 = vmul.f32 %v2230, %v2230
        %v2409 = vmul.f32 %v2341, %v2341
        %v2410 = vmul.f32 %v2343, %v2343
        %v2411 = vmul.f32 %v2232, %v2232
        %v2412 = vmul.f32 %v2234, %v2234
        %v2413 = vmul.f32 %v2345, %v2345
        %v2414 = vmul.f32 %v2347, %v2347
        %v2415 = vmul.f32 %v2238, %v2238
        %v2416 = vmul.f32 %v2240, %v2240
        %v2417 = vmul.f32 %v2351, %v2351
        %v2418 = vmul.f32 %v2353, %v2353
        %v2419 = vmul.f32 %v2242, %v2242
        %v2420 = vmul.f32 %v2244, %v2244
        %v2421 = vmul.f32 %v2355, %v2355
        %v2422 = vmul.f32 %v2357, %v2357
        %v2423 = vadd.f32 %v2359, %v2360
        %v2424 = vadd.f32 %v2423, %v2361
        %v2425 = vadd.f32 %v2424, %v2362
        %2426 = vadd.xlane.f32.xlu0 %v2425
        %v2427 = vpop.xlane.xlu0 %2426
        %v2428 = vadd.f32 %v2363, %v2364
        %v2429 = vadd.f32 %v2428, %v2365
        %v2430 = vadd.f32 %v2429, %v2366
        %2431 = vadd.xlane.f32.xlu0 %v2430
        %v2432 = vpop.xlane.xlu0 %2431
        %v2433 = vadd.f32 %v2367, %v2368
        %v2434 = vadd.f32 %v2433, %v2369
        %v2435 = vadd.f32 %v2434, %v2370
        %2436 = vadd.xlane.f32.xlu0 %v2435
        %v2437 = vpop.xlane.xlu0 %2436
        %v2438 = vadd.f32 %v2371, %v2372
        %v2439 = vadd.f32 %v2438, %v2373
        %v2440 = vadd.f32 %v2439, %v2374
        %2441 = vadd.xlane.f32.xlu0 %v2440
        %v2442 = vpop.xlane.xlu0 %2441
        %v2443 = vadd.f32 %v2375, %v2376
        %v2444 = vadd.f32 %v2443, %v2377
        %v2445 = vadd.f32 %v2444, %v2378
        %2446 = vadd.xlane.f32.xlu0 %v2445
        %v2447 = vpop.xlane.xlu0 %2446
        %v2448 = vadd.f32 %v2379, %v2380
        %v2449 = vadd.f32 %v2448, %v2381
        %v2450 = vadd.f32 %v2449, %v2382
        %2451 = vadd.xlane.f32.xlu0 %v2450
        %v2452 = vpop.xlane.xlu0 %2451
        %v2453 = vadd.f32 %v2383, %v2384
        %v2454 = vadd.f32 %v2453, %v2385
        %v2455 = vadd.f32 %v2454, %v2386
        %2456 = vadd.xlane.f32.xlu0 %v2455
        %v2457 = vpop.xlane.xlu0 %2456
        %v2458 = vadd.f32 %v2387, %v2388
        %v2459 = vadd.f32 %v2458, %v2389
        %v2460 = vadd.f32 %v2459, %v2390
        %2461 = vadd.xlane.f32.xlu0 %v2460
        %v2462 = vpop.xlane.xlu0 %2461
        %v2463 = vadd.f32 %v2391, %v2392
        %v2464 = vadd.f32 %v2463, %v2393
        %v2465 = vadd.f32 %v2464, %v2394
        %2466 = vadd.xlane.f32.xlu0 %v2465
        %v2467 = vpop.xlane.xlu0 %2466
        %v2468 = vadd.f32 %v2395, %v2396
        %v2469 = vadd.f32 %v2468, %v2397
        %v2470 = vadd.f32 %v2469, %v2398
        %2471 = vadd.xlane.f32.xlu0 %v2470
        %v2472 = vpop.xlane.xlu0 %2471
        %v2473 = vadd.f32 %v2399, %v2400
        %v2474 = vadd.f32 %v2473, %v2401
        %v2475 = vadd.f32 %v2474, %v2402
        %2476 = vadd.xlane.f32.xlu0 %v2475
        %v2477 = vpop.xlane.xlu0 %2476
        %v2478 = vadd.f32 %v2403, %v2404
        %v2479 = vadd.f32 %v2478, %v2405
        %v2480 = vadd.f32 %v2479, %v2406
        %2481 = vadd.xlane.f32.xlu0 %v2480
        %v2482 = vpop.xlane.xlu0 %2481
        %v2483 = vadd.f32 %v2407, %v2408
        %v2484 = vadd.f32 %v2483, %v2409
        %v2485 = vadd.f32 %v2484, %v2410
        %2486 = vadd.xlane.f32.xlu0 %v2485
        %v2487 = vpop.xlane.xlu0 %2486
        %v2488 = vadd.f32 %v2411, %v2412
        %v2489 = vadd.f32 %v2488, %v2413
        %v2490 = vadd.f32 %v2489, %v2414
        %2491 = vadd.xlane.f32.xlu0 %v2490
        %v2492 = vpop.xlane.xlu0 %2491
        %v2493 = vadd.f32 %v2415, %v2416
        %v2494 = vadd.f32 %v2493, %v2417
        %v2495 = vadd.f32 %v2494, %v2418
        %2496 = vadd.xlane.f32.xlu0 %v2495
        %v2497 = vpop.xlane.xlu0 %2496
        %v2498 = vadd.f32 %v2419, %v2420
        %v2499 = vadd.f32 %v2498, %v2421
        %v2500 = vadd.f32 %v2499, %v2422
        %2501 = vadd.xlane.f32.xlu0 %v2500
        %v2502 = vpop.xlane.xlu0 %2501
        %v2503 = vmax.f32 %v2427, 1e-24
        %v2504 = vmax.f32 %v2432, 1e-24
        %v2505 = vmax.f32 %v2437, 1e-24
        %v2506 = vmax.f32 %v2442, 1e-24
        %v2507 = vmax.f32 %v2447, 1e-24
        %v2508 = vmax.f32 %v2452, 1e-24
        %v2509 = vmax.f32 %v2457, 1e-24
        %v2510 = vmax.f32 %v2462, 1e-24
        %v2511 = vmax.f32 %v2467, 1e-24
        %v2512 = vmax.f32 %v2472, 1e-24
        %v2513 = vmax.f32 %v2477, 1e-24
        %v2514 = vmax.f32 %v2482, 1e-24
        %v2515 = vmax.f32 %v2487, 1e-24
        %v2516 = vmax.f32 %v2492, 1e-24
        %v2517 = vmax.f32 %v2497, 1e-24
        %v2518 = vmax.f32 %v2502, 1e-24
        %v2519 = vrsqrt.pop %v2503
        %v2520 = vrsqrt.pop %v2504
        %v2521 = vrsqrt.pop %v2505
        %v2522 = vrsqrt.pop %v2506
        %v2523 = vrsqrt.pop %v2507
        %v2524 = vrsqrt.pop %v2508
        %v2525 = vrsqrt.pop %v2509
        %v2526 = vrsqrt.pop %v2510
        %v2527 = vrsqrt.pop %v2511
        %v2528 = vrsqrt.pop %v2512
        %v2529 = vrsqrt.pop %v2513
        %v2530 = vrsqrt.pop %v2514
        %v2531 = vrsqrt.pop %v2515
        %v2532 = vrsqrt.pop %v2516
        %v2533 = vrsqrt.pop %v2517
        %v2534 = vrsqrt.pop %v2518
        %v2535 = vmul.f32 %v2168, %v2519
        %v2536 = vmul.f32 %v2170, %v2519
        %v2537 = vmul.f32 %v2281, %v2519
        %v2538 = vmul.f32 %v2283, %v2519
        %v2539 = vmul.f32 %v2172, %v2520
        %v2540 = vmul.f32 %v2174, %v2520
        %v2541 = vmul.f32 %v2285, %v2520
        %v2542 = vmul.f32 %v2287, %v2520
        %v2543 = vmul.f32 %v2178, %v2521
        %v2544 = vmul.f32 %v2180, %v2521
        %v2545 = vmul.f32 %v2291, %v2521
        %v2546 = vmul.f32 %v2293, %v2521
        %v2547 = vmul.f32 %v2182, %v2522
        %v2548 = vmul.f32 %v2184, %v2522
        %v2549 = vmul.f32 %v2295, %v2522
        %v2550 = vmul.f32 %v2297, %v2522
        %v2551 = vmul.f32 %v2188, %v2523
        %v2552 = vmul.f32 %v2190, %v2523
        %v2553 = vmul.f32 %v2301, %v2523
        %v2554 = vmul.f32 %v2303, %v2523
        %v2555 = vmul.f32 %v2192, %v2524
        %v2556 = vmul.f32 %v2194, %v2524
        %v2557 = vmul.f32 %v2305, %v2524
        %v2558 = vmul.f32 %v2307, %v2524
        %v2559 = vmul.f32 %v2198, %v2525
        %v2560 = vmul.f32 %v2200, %v2525
        %v2561 = vmul.f32 %v2311, %v2525
        %v2562 = vmul.f32 %v2313, %v2525
        %v2563 = vmul.f32 %v2202, %v2526
        %v2564 = vmul.f32 %v2204, %v2526
        %v2565 = vmul.f32 %v2315, %v2526
        %v2566 = vmul.f32 %v2317, %v2526
        %v2567 = vmul.f32 %v2208, %v2527
        %v2568 = vmul.f32 %v2210, %v2527
        %v2569 = vmul.f32 %v2321, %v2527
        %v2570 = vmul.f32 %v2323, %v2527
        %v2571 = vmul.f32 %v2212, %v2528
        %v2572 = vmul.f32 %v2214, %v2528
        %v2573 = vmul.f32 %v2325, %v2528
        %v2574 = vmul.f32 %v2327, %v2528
        %v2575 = vmul.f32 %v2218, %v2529
        %v2576 = vmul.f32 %v2220, %v2529
        %v2577 = vmul.f32 %v2331, %v2529
        %v2578 = vmul.f32 %v2333, %v2529
        %v2579 = vmul.f32 %v2222, %v2530
        %v2580 = vmul.f32 %v2224, %v2530
        %v2581 = vmul.f32 %v2335, %v2530
        %v2582 = vmul.f32 %v2337, %v2530
        %v2583 = vmul.f32 %v2228, %v2531
        %v2584 = vmul.f32 %v2230, %v2531
        %v2585 = vmul.f32 %v2341, %v2531
        %v2586 = vmul.f32 %v2343, %v2531
        %v2587 = vmul.f32 %v2232, %v2532
        %v2588 = vmul.f32 %v2234, %v2532
        %v2589 = vmul.f32 %v2345, %v2532
        %v2590 = vmul.f32 %v2347, %v2532
        %v2591 = vmul.f32 %v2238, %v2533
        %v2592 = vmul.f32 %v2240, %v2533
        %v2593 = vmul.f32 %v2351, %v2533
        %v2594 = vmul.f32 %v2353, %v2533
        %v2595 = vmul.f32 %v2242, %v2534
        %v2596 = vmul.f32 %v2244, %v2534
        %v2597 = vmul.f32 %v2355, %v2534
        %v2598 = vmul.f32 %v2357, %v2534
        %2599 = vst [vmem:[%s353] sm:$0xff] %v2535
        %2600 = vst [vmem:[%s353 + $0x8] sm:$0xff] %v2536
        %2601 = vst [vmem:[%s353 + $0x10] sm:$0xff] %v2537
        %2602 = vst [vmem:[%s353 + $0x18] sm:$0xff] %v2538
        %2603 = vst [vmem:[%s353 + $0x20] sm:$0xff] %v2539
        %2604 = vst [vmem:[%s353 + $0x28] sm:$0xff] %v2540
        %2605 = vst [vmem:[%s353 + $0x30] sm:$0xff] %v2541
        %2606 = vst [vmem:[%s353 + $0x38] sm:$0xff] %v2542
        %2607 = vst [vmem:[%s353 + $0x40] sm:$0xff] %v2543
        %2608 = vst [vmem:[%s353 + $0x48] sm:$0xff] %v2544
        %2609 = vst [vmem:[%s353 + $0x50] sm:$0xff] %v2545
        %2610 = vst [vmem:[%s353 + $0x58] sm:$0xff] %v2546
        %2611 = vst [vmem:[%s353 + $0x60] sm:$0xff] %v2547
        %2612 = vst [vmem:[%s353 + $0x68] sm:$0xff] %v2548
        %2613 = vst [vmem:[%s353 + $0x70] sm:$0xff] %v2549
        %2614 = vst [vmem:[%s353 + $0x78] sm:$0xff] %v2550
        %2615 = vst [vmem:[%s353 + $0x80] sm:$0xff] %v2551
        %2616 = vst [vmem:[%s353 + $0x88] sm:$0xff] %v2552
        %2617 = vst [vmem:[%s353 + $0x90] sm:$0xff] %v2553
        %2618 = vst [vmem:[%s353 + $0x98] sm:$0xff] %v2554
        %2619 = vst [vmem:[%s353 + $0xa0] sm:$0xff] %v2555
        %2620 = vst [vmem:[%s353 + $0xa8] sm:$0xff] %v2556
        %2621 = vst [vmem:[%s353 + $0xb0] sm:$0xff] %v2557
        %2622 = vst [vmem:[%s353 + $0xb8] sm:$0xff] %v2558
        %2623 = vst [vmem:[%s353 + $0xc0] sm:$0xff] %v2559
        %2624 = vst [vmem:[%s353 + $0xc8] sm:$0xff] %v2560
        %2625 = vst [vmem:[%s353 + $0xd0] sm:$0xff] %v2561
        %2626 = vst [vmem:[%s353 + $0xd8] sm:$0xff] %v2562
        %2627 = vst [vmem:[%s353 + $0xe0] sm:$0xff] %v2563
        %2628 = vst [vmem:[%s353 + $0xe8] sm:$0xff] %v2564
        %2629 = vst [vmem:[%s353 + $0xf0] sm:$0xff] %v2565
        %2630 = vst [vmem:[%s353 + $0xf8] sm:$0xff] %v2566
        %2631 = vst [vmem:[%s353 + $0x100] sm:$0xff] %v2567
        %2632 = vst [vmem:[%s353 + $0x108] sm:$0xff] %v2568
        %2633 = vst [vmem:[%s353 + $0x110] sm:$0xff] %v2569
        %2634 = vst [vmem:[%s353 + $0x118] sm:$0xff] %v2570
        %2635 = vst [vmem:[%s353 + $0x120] sm:$0xff] %v2571
        %2636 = vst [vmem:[%s353 + $0x128] sm:$0xff] %v2572
        %2637 = vst [vmem:[%s353 + $0x130] sm:$0xff] %v2573
        %2638 = vst [vmem:[%s353 + $0x138] sm:$0xff] %v2574
        %2639 = vst [vmem:[%s353 + $0x140] sm:$0xff] %v2575
        %2640 = vst [vmem:[%s353 + $0x148] sm:$0xff] %v2576
        %2641 = vst [vmem:[%s353 + $0x150] sm:$0xff] %v2577
        %2642 = vst [vmem:[%s353 + $0x158] sm:$0xff] %v2578
        %2643 = vst [vmem:[%s353 + $0x160] sm:$0xff] %v2579
        %2644 = vst [vmem:[%s353 + $0x168] sm:$0xff] %v2580
        %2645 = vst [vmem:[%s353 + $0x170] sm:$0xff] %v2581
        %2646 = vst [vmem:[%s353 + $0x178] sm:$0xff] %v2582
        %2647 = vst [vmem:[%s353 + $0x180] sm:$0xff] %v2583
        %2648 = vst [vmem:[%s353 + $0x188] sm:$0xff] %v2584
        %2649 = vst [vmem:[%s353 + $0x190] sm:$0xff] %v2585
        %2650 = vst [vmem:[%s353 + $0x198] sm:$0xff] %v2586
        %2651 = vst [vmem:[%s353 + $0x1a0] sm:$0xff] %v2587
        %2652 = vst [vmem:[%s353 + $0x1a8] sm:$0xff] %v2588
        %2653 = vst [vmem:[%s353 + $0x1b0] sm:$0xff] %v2589
        %2654 = vst [vmem:[%s353 + $0x1b8] sm:$0xff] %v2590
        %2655 = vst [vmem:[%s353 + $0x1c0] sm:$0xff] %v2591
        %2656 = vst [vmem:[%s353 + $0x1c8] sm:$0xff] %v2592
        %2657 = vst [vmem:[%s353 + $0x1d0] sm:$0xff] %v2593
        %2658 = vst [vmem:[%s353 + $0x1d8] sm:$0xff] %v2594
        %2659 = vst [vmem:[%s353 + $0x1e0] sm:$0xff] %v2595
        %2660 = vst [vmem:[%s353 + $0x1e8] sm:$0xff] %v2596
        %2661 = vst [vmem:[%s353 + $0x1f0] sm:$0xff] %v2597
        %2662 = vst [vmem:[%s353 + $0x1f8] sm:$0xff] %v2598
        %s2663 = sand.u32 %s186, 1
        %s2664 = scalar_lea.sflag [#allocation4], %s2663
        %s2665 = sand.u32 %s186, 1
        %s2666 = smul.addr %s2665, 512
        %s2667 = scalar_lea.vmem [#allocation11], %s2666
        // Predicated region
        $region69: #{tpu_custom_call.1} parent=47 // pred_check
          %p2668 = pneg %p196
        $region70: #{tpu_custom_call.1} parent=47 // pred_check_branch
          %2670 = sbr.rel (%p2668) target = $region72
        $region71: #{tpu_custom_call.1} parent=47 // pred_region
          %s2671 = smul.u32 16, %s26
          %s2673 = ssub.s32 8192, 8192
          %2674 = vsyncadd %s2664, %s2673
          %s2675 = smul.addr %s2671, 4
          %s2676 = smul.addr %s2675, 128
          %s2677 = scalar_lea.hbm %s7, %s2676
          %s2678 = sshll.u32 %s2667, 4
          %s2679 = int_to_ptr.vmem [resolvable:$true] %s2678
          %2684 = dma.vmem_to_hbm [thread:$0]  %s2679, 8192, %s2677, %s2664, 512, 512, 32
        $region72: #{tpu_custom_call.1} parent=47 // pred_fallthru
          _
      $region48: #{tpu_custom_call.1} parent=5 // pred_fallthru
        _
      %p2685 = scmp.le.s32.totalorder 2, %s21
      // Predicated region
      $region73: #{tpu_custom_call.1} parent=5 // pred_check
        %p2686 = pneg %p2685
      $region74: #{tpu_custom_call.1} parent=5 // pred_check_branch
        %2688 = sbr.rel (%p2686) target = $region76
      $region75: #{tpu_custom_call.1} parent=5 // pred_region
        %s2689 = ssub.s32 %s21, 2
        // Predicated region
        $region77: #{tpu_custom_call.1} parent=75 // pred_check
          %p2690 = pneg %p202
        $region78: #{tpu_custom_call.1} parent=75 // pred_check_branch
          %2692 = sbr.rel (%p2690) target = $region80
        $region79: #{tpu_custom_call.1} parent=75 // pred_region
          %s2693 = sand.u32 %s187, 1
          %s2694 = scalar_lea.sflag [#allocation4], %s2693
          %s2695 = sand.u32 %s187, 1
          %s2696 = smul.addr %s2695, 512
          %s2697 = scalar_lea.vmem [#allocation11], %s2696
          %2698 = dma.done %s2694, 8192
        $region80: #{tpu_custom_call.1} parent=75 // pred_fallthru
          _
      $region76: #{tpu_custom_call.1} parent=5 // pred_fallthru
        _
    $region6: #{tpu_custom_call.1} parent=1 // loop_footer
      %s25 = sadd.s32 1, %s21
    $region7: #{tpu_custom_call.1} parent=1 // loop_footer_branch
      %20 = sbr.rel target = $region3
    $region8: #{tpu_custom_call.1} parent=1 // loop_exit
      _
    %2699 = vsyncpa [#allocation3], 1
    %s2700 = scalar_lea.sflag [#allocation3], 1
    %2701 = vsyncpa %s2700, 1
    %2702 = vsyncpa [#allocation6], 1
    %2703 = vsyncpa [#allocation9], 1
    %2704 = vsyncpa [#allocation4], 1
    %s2705 = scalar_lea.sflag [#allocation4], 1
    %2706 = vsyncpa %s2705, 1

</llo_original>
